<compile_context>
chip_gen: v5e
topology: v5e:2x2
jax: 0.10.0
libtpu: 0.0.40
codegen_flags: <defaults>
</compile_context>

<pallas_src>
import jax
import jax.numpy as jnp
from jax.experimental import pallas as pl
from jax.experimental.pallas import tpu as pltpu

_LANE = 128
_SUBLANE = 8


def _round_up(n, m):
    return ((n + m - 1) // m) * m


def _cdiv(a, b):
    return -(-a // b)


def _vmem_capacity_bytes():
    try:
        return int(pltpu.get_tpu_info().vmem_capacity_bytes)
    except Exception:
        return 64 * 2**20  # conservative default (v7x per-TC VMEM)


def _encoder_kernel(x_ref, w1_ref, b1_ref, w2_ref, b2_ref, o_ref):
    """One (batch-tile, hidden-tile) grid step of Linear -> ReLU -> Linear."""
    j = pl.program_id(1)                       # hidden (reduction) axis

    xb = x_ref[...].astype(jnp.bfloat16)       # cast once, inside VMEM
    h = jnp.dot(xb, w1_ref[...], preferred_element_type=jnp.float32)
    h = jnp.maximum(h + b1_ref[...], 0.0)      # bias + ReLU in f32
    part = jnp.dot(h.astype(w2_ref.dtype), w2_ref[...],
                   preferred_element_type=jnp.float32)

    @pl.when(j == 0)
    def _():                                   # first hidden tile: init + b2
        o_ref[...] = part + b2_ref[...]

    @pl.when(j > 0)
    def _():                                   # later hidden tiles: accumulate
        o_ref[...] += part


def prepare_params(params):
    """Pad feature dims to lane-dense multiples of 128 and cast weights to
    bf16 once (outside the per-call path).  Zero padding is exact."""
    w1, b1, w2, b2 = params["w1"], params["b1"], params["w2"], params["b2"]
    D, H = w1.shape
    L = w2.shape[1]
    Hp, Lp = _round_up(H, _LANE), _round_up(L, _LANE)
    b1 = jnp.reshape(b1, (1, H))
    b2 = jnp.reshape(b2, (1, L))
    return dict(
        w1=jnp.pad(w1, ((0, 0), (0, Hp - H))).astype(jnp.bfloat16),
        b1=jnp.pad(b1, ((0, 0), (0, Hp - H))).astype(jnp.float32),
        w2=jnp.pad(w2, ((0, Hp - H), (0, Lp - L))).astype(jnp.bfloat16),
        b2=jnp.pad(b2, ((0, 0), (0, Lp - L))).astype(jnp.float32),
        dims=(D, H, L),
    )


def encoder_forward(x, prepared, *, batch_tile=512):
    """x: (..., D) float32.  prepared: output of prepare_params()."""
    D, H, L = prepared["dims"]
    lead = x.shape[:-1]
    x2 = x.reshape((-1, x.shape[-1]))
    B = x2.shape[0]
    assert x2.shape[1] == D

    Hp = prepared["w1"].shape[1]
    Lp = prepared["w2"].shape[1]

    cap = _vmem_capacity_bytes()
    budget = max(min(cap - 8 * 2**20, 100 * 2**20), 16 * 2**20)

    def est(tb, th):
        return (2 * tb * D * 4        # x f32 tile (double-buffered)
                + tb * D * 2          # in-kernel bf16 copy of x
                + 2 * D * th * 2      # w1 bf16 tile (worst case double-buffered)
                + 2 * th * 4          # b1
                + 2 * th * Lp * 2     # w2 bf16 tile
                + 2 * Lp * 4          # b2
                + 2 * tb * Lp * 4     # f32 output tile / accumulator
                + tb * th * 4         # h (f32)
                + tb * th * 2         # h cast to bf16
                + tb * Lp * 4         # f32 second-matmul partial
                + 2 * 2**20)          # Mosaic internal scratch headroom

    tb_cap = max(_SUBLANE,
                 min(_round_up(batch_tile, _SUBLANE), _round_up(B, _SUBLANE)))

    def max_tb_for(th):
        fixed = est(0, th)
        if fixed >= budget:
            return 0
        per_row = (est(_SUBLANE, th) - fixed) // _SUBLANE
        tb = (budget - fixed) // max(per_row, 1)
        return min(tb_cap, (tb // _SUBLANE) * _SUBLANE)

    # Hidden tile th: a 128-multiple that evenly divides Hp.  Prefer the
    # largest th that still leaves room for a >=128-row batch tile.
    m = Hp // _LANE
    th_cands = [_LANE * d for d in range(m, 0, -1) if m % d == 0]
    th, tb = th_cands[-1], _SUBLANE
    for cand in th_cands:
        t = max_tb_for(cand)
        if t >= min(tb_cap, 128):
            th, tb = cand, t
            break
    else:
        th = th_cands[-1]
        tb = max(_SUBLANE, max_tb_for(th))
    # TODO(synk): also tile the input-feature (D) contraction for extremely
    # large n_input (needs an f32 hidden accumulator over a third grid axis).

    # Megacore guard: give the parallel batch axis >= 2 evenly sized steps.
    if B >= 2 * _SUBLANE and _cdiv(B, tb) < 2:
        tb = _round_up(_cdiv(B, 2), _SUBLANE)
    # Keep the batch block a multiple of 8 rows that never exceeds the array.
    tb = B if B < _SUBLANE else min(tb, (B // _SUBLANE) * _SUBLANE)

    n_b = _cdiv(B, tb)
    n_h = Hp // th
    vmem_limit = int(budget)

    def _invoke(single_buffer):
        def inv_spec(shape, imap):        # fully grid-invariant blocks
            if single_buffer:
                return pl.BlockSpec(shape, imap, pipeline_mode=pl.Buffered(1))
            return pl.BlockSpec(shape, imap)

        # w1/b1/w2 are grid-invariant only when the hidden dim is untiled.
        w_spec = inv_spec if n_h == 1 else (lambda s, f: pl.BlockSpec(s, f))

        return pl.pallas_call(
            _encoder_kernel,
            out_shape=jax.ShapeDtypeStruct((B, Lp), x2.dtype),
            grid_spec=pltpu.PrefetchScalarGridSpec(
                num_scalar_prefetch=0,
                grid=(n_b, n_h),
                in_specs=[
                    pl.BlockSpec((tb, D), lambda i, j: (i, 0)),   # x (f32)
                    w_spec((D, th), lambda i, j: (0, j)),         # w1 (bf16)
                    w_spec((1, th), lambda i, j: (0, j)),         # b1 (f32)
                    w_spec((th, Lp), lambda i, j: (j, 0)),        # w2 (bf16)
                    inv_spec((1, Lp), lambda i, j: (0, 0)),       # b2 (f32)
                ],
                out_specs=pl.BlockSpec((tb, Lp), lambda i, j: (i, 0)),
            ),
            compiler_params=pltpu.CompilerParams(
                dimension_semantics=("parallel", "arbitrary"),
                vmem_limit_bytes=vmem_limit),
        )(x2, prepared["w1"], prepared["b1"], prepared["w2"], prepared["b2"])

    try:
        out_p = _invoke(True)
    except Exception:
        # pl.Buffered(1) not accepted by this JAX version -> default buffering.
        out_p = _invoke(False)

    return out_p[:, :L].reshape(lead + (L,))


def init_params(key, D, H, L):
    """PyTorch-Linear-style init: U(-1/sqrt(fan_in), 1/sqrt(fan_in))."""
    ks = jax.random.split(key, 4)

    def lin(kw, kb, fan_in, fan_out):
        bound = 1.0 / jnp.sqrt(fan_in)
        w = jax.random.uniform(kw, (fan_in, fan_out), jnp.float32, -bound, bound)
        b = jax.random.uniform(kb, (1, fan_out), jnp.float32, -bound, bound)
        return w, b

    w1, b1 = lin(ks[0], ks[1], D, H)
    w2, b2 = lin(ks[2], ks[3], H, L)
    return dict(w1=w1, b1=b1, w2=w2, b2=b2)


def reference_forward_f32(x, p):
    h = jnp.maximum(x @ p["w1"] + p["b1"], 0.0)
    return h @ p["w2"] + p["b2"]


def reference_forward_bf16(x, p):
    """Same bf16-input / f32-accumulate math as the kernel (tight check)."""
    xb = x.astype(jnp.bfloat16)
    w1 = p["w1"].astype(jnp.bfloat16)
    w2 = p["w2"].astype(jnp.bfloat16)
    h = jnp.dot(xb, w1, preferred_element_type=jnp.float32) + p["b1"]
    h = jnp.maximum(h, 0.0)
    z = jnp.dot(h.astype(jnp.bfloat16), w2,
                preferred_element_type=jnp.float32) + p["b2"]
    return z.astype(x.dtype)


if __name__ == "__main__":
    # Small, intentionally non-lane-aligned feature dims to exercise padding;
    # B=512 gives a 2-step parallel batch grid (both v7x TensorCores busy).
    B, D, H, L = 512, 64, 32, 16

    key = jax.random.PRNGKey(0)
    kx, kp = jax.random.split(key)
    x = jax.random.normal(kx, (B, D), jnp.float32)
    params = init_params(kp, D, H, L)
    prepared = prepare_params(params)          # pad/cast weights once

    out = jax.block_until_ready(encoder_forward(x, prepared))
    assert out.shape == (B, L)

    ref_bf16 = reference_forward_bf16(x, params)
    ref_f32 = reference_forward_f32(x, params)
    assert jnp.allclose(out, ref_bf16, atol=1e-4, rtol=1e-4), "mismatch vs bf16 reference"
    assert jnp.allclose(out, ref_f32, atol=5e-2, rtol=5e-2), "mismatch vs f32 reference"

    print("KERNEL_OK")
</pallas_src>

<mosaic_0001>
module attributes {stable_mosaic.version = 11 : i64} {
  func.func @_encoder_kernel(%arg0: i32, %arg1: i32, %arg2: memref<256x64xf32, #tpu.memory_space<vmem>>, %arg3: memref<64x128xbf16, #tpu.memory_space<vmem>>, %arg4: memref<1x128xf32, #tpu.memory_space<vmem>>, %arg5: memref<128x128xbf16, #tpu.memory_space<vmem>>, %arg6: memref<1x128xf32, #tpu.memory_space<vmem>>, %arg7: memref<256x128xf32, #tpu.memory_space<vmem>>) attributes {dimension_semantics = [#tpu.dimension_semantics<parallel>, #tpu.dimension_semantics<arbitrary>], iteration_bounds = array<i64: 2, 1>, scalar_prefetch = 0 : i64, scratch_operands = 0 : i64, tpu.core_type = #tpu.core_type<tc>, window_params = [{transform_indices = @transform_0, window_bounds = array<i64: 256, 64>}, {pipeline_mode = #tpu.pipeline_mode<synchronous>, transform_indices = @transform_1, window_bounds = array<i64: 64, 128>}, {pipeline_mode = #tpu.pipeline_mode<synchronous>, transform_indices = @transform_2, window_bounds = array<i64: 1, 128>}, {pipeline_mode = #tpu.pipeline_mode<synchronous>, transform_indices = @transform_3, window_bounds = array<i64: 128, 128>}, {pipeline_mode = #tpu.pipeline_mode<synchronous>, transform_indices = @transform_4, window_bounds = array<i64: 1, 128>}, {transform_indices = @transform_5, window_bounds = array<i64: 256, 128>}]} {
    %c0 = arith.constant 0 : index
    %c0_0 = arith.constant 0 : index
    %0 = vector.load %arg2[%c0, %c0_0] : memref<256x64xf32, #tpu.memory_space<vmem>>, vector<256x64xf32>
    %1 = arith.truncf %0 : vector<256x64xf32> to vector<256x64xbf16>
    %c0_1 = arith.constant 0 : index
    %c0_2 = arith.constant 0 : index
    %2 = vector.load %arg3[%c0_1, %c0_2] : memref<64x128xbf16, #tpu.memory_space<vmem>>, vector<64x128xbf16>
    %cst = arith.constant dense<0.000000e+00> : vector<256x128xf32>
    %3 = tpu.matmul %1, %2, %cst {dimension_numbers = #tpu.dot_dimension_numbers<[1], [0], [0], [1], [0, 0, 1, 1], [], []>} : vector<256x64xbf16>, vector<64x128xbf16>, vector<256x128xf32> -> vector<256x128xf32>
    %c0_3 = arith.constant 0 : index
    %c0_4 = arith.constant 0 : index
    %4 = vector.load %arg4[%c0_3, %c0_4] : memref<1x128xf32, #tpu.memory_space<vmem>>, vector<1x128xf32>
    %5 = vector.broadcast %4 : vector<1x128xf32> to vector<256x128xf32>
    %6 = arith.addf %3, %5 : vector<256x128xf32>
    %cst_5 = arith.constant 0.000000e+00 : f32
    %7 = vector.broadcast %cst_5 : f32 to vector<256x128xf32>
    %8 = arith.maximumf %6, %7 : vector<256x128xf32>
    %9 = arith.truncf %8 : vector<256x128xf32> to vector<256x128xbf16>
    %c0_6 = arith.constant 0 : index
    %c0_7 = arith.constant 0 : index
    %10 = vector.load %arg5[%c0_6, %c0_7] : memref<128x128xbf16, #tpu.memory_space<vmem>>, vector<128x128xbf16>
    %cst_8 = arith.constant dense<0.000000e+00> : vector<256x128xf32>
    %11 = tpu.matmul %9, %10, %cst_8 {dimension_numbers = #tpu.dot_dimension_numbers<[1], [0], [0], [1], [0, 0, 1, 1], [], []>} : vector<256x128xbf16>, vector<128x128xbf16>, vector<256x128xf32> -> vector<256x128xf32>
    %c0_i32 = arith.constant 0 : i32
    %12 = arith.cmpi eq, %arg1, %c0_i32 : i32
    %13 = arith.extui %12 : i1 to i32
    %c0_i32_9 = arith.constant 0 : i32
    %14 = arith.cmpi ne, %13, %c0_i32_9 : i32
    scf.if %14 {
      %c0_12 = arith.constant 0 : index
      %c0_13 = arith.constant 0 : index
      %18 = vector.load %arg6[%c0_12, %c0_13] : memref<1x128xf32, #tpu.memory_space<vmem>>, vector<1x128xf32>
      %19 = vector.broadcast %18 : vector<1x128xf32> to vector<256x128xf32>
      %20 = arith.addf %11, %19 : vector<256x128xf32>
      %c0_14 = arith.constant 0 : index
      %c0_15 = arith.constant 0 : index
      %21 = vector.load %arg7[%c0_14, %c0_15] : memref<256x128xf32, #tpu.memory_space<vmem>>, vector<256x128xf32>
      tpu.vector_store %arg7[%c0_14, %c0_15], %20 {strides = array<i32>} : memref<256x128xf32, #tpu.memory_space<vmem>>, vector<256x128xf32>,
    } else {
    }
    %c0_i32_10 = arith.constant 0 : i32
    %15 = arith.cmpi sgt, %arg1, %c0_i32_10 : i32
    %16 = arith.extui %15 : i1 to i32
    %c0_i32_11 = arith.constant 0 : i32
    %17 = arith.cmpi ne, %16, %c0_i32_11 : i32
    scf.if %17 {
      %c0_12 = arith.constant 0 : index
      %c0_13 = arith.constant 0 : index
      %18 = vector.load %arg7[%c0_12, %c0_13] : memref<256x128xf32, #tpu.memory_space<vmem>>, vector<256x128xf32>
      %19 = arith.addf %18, %11 : vector<256x128xf32>
      %c0_14 = arith.constant 0 : index
      %c0_15 = arith.constant 0 : index
      %20 = vector.load %arg7[%c0_14, %c0_15] : memref<256x128xf32, #tpu.memory_space<vmem>>, vector<256x128xf32>
      tpu.vector_store %arg7[%c0_14, %c0_15], %19 {strides = array<i32>} : memref<256x128xf32, #tpu.memory_space<vmem>>, vector<256x128xf32>,
    } else {
    }
    return
  }
  func.func @transform_0(%arg0: i32, %arg1: i32) -> (i32, i32) {
    %c0_i32 = arith.constant 0 : i32
    %c0_i32_0 = arith.constant 0 : i32
    return %arg0, %c0_i32 : i32, i32
  }
  func.func @transform_1(%arg0: i32, %arg1: i32) -> (i32, i32) {
    %c0_i32 = arith.constant 0 : i32
    %c0_i32_0 = arith.constant 0 : i32
    return %c0_i32, %arg1 : i32, i32
  }
  func.func @transform_2(%arg0: i32, %arg1: i32) -> (i32, i32) {
    %c0_i32 = arith.constant 0 : i32
    %c0_i32_0 = arith.constant 0 : i32
    return %c0_i32, %arg1 : i32, i32
  }
  func.func @transform_3(%arg0: i32, %arg1: i32) -> (i32, i32) {
    %c0_i32 = arith.constant 0 : i32
    %c0_i32_0 = arith.constant 0 : i32
    return %arg1, %c0_i32 : i32, i32
  }
  func.func @transform_4(%arg0: i32, %arg1: i32) -> (i32, i32) {
    %c0_i32 = arith.constant 0 : i32
    %c0_i32_0 = arith.constant 0 : i32
    %c0_i32_1 = arith.constant 0 : i32
    return %c0_i32, %c0_i32_0 : i32, i32
  }
  func.func @transform_5(%arg0: i32, %arg1: i32) -> (i32, i32) {
    %c0_i32 = arith.constant 0 : i32
    %c0_i32_0 = arith.constant 0 : i32
    return %arg0, %c0_i32 : i32, i32
  }
}

module attributes {stable_mosaic.version = 11 : i64} {
  func.func @_encoder_kernel(%arg0: i32, %arg1: i32, %arg2: memref<256x64xf32, #tpu.memory_space<vmem>>, %arg3: memref<64x128xbf16, #tpu.memory_space<vmem>>, %arg4: memref<1x128xf32, #tpu.memory_space<vmem>>, %arg5: memref<128x128xbf16, #tpu.memory_space<vmem>>, %arg6: memref<1x128xf32, #tpu.memory_space<vmem>>, %arg7: memref<256x128xf32, #tpu.memory_space<vmem>>) attributes {dimension_semantics = [#tpu.dimension_semantics<parallel>, #tpu.dimension_semantics<arbitrary>], iteration_bounds = array<i64: 2, 1>, scalar_prefetch = 0 : i64, scratch_operands = 0 : i64, tpu.core_type = #tpu.core_type<tc>, window_params = [{transform_indices = @transform_0, window_bounds = array<i64: 256, 64>}, {transform_indices = @transform_1, window_bounds = array<i64: 64, 128>}, {transform_indices = @transform_2, window_bounds = array<i64: 1, 128>}, {transform_indices = @transform_3, window_bounds = array<i64: 128, 128>}, {pipeline_mode = #tpu.pipeline_mode<synchronous>, transform_indices = @transform_4, window_bounds = array<i64: 1, 128>}, {transform_indices = @transform_5, window_bounds = array<i64: 256, 128>}]} {
    %c0 = arith.constant 0 : index
    %c0_0 = arith.constant 0 : index
    %0 = vector.load %arg2[%c0, %c0_0] : memref<256x64xf32, #tpu.memory_space<vmem>>, vector<256x64xf32>
    %1 = arith.truncf %0 : vector<256x64xf32> to vector<256x64xbf16>
    %c0_1 = arith.constant 0 : index
    %c0_2 = arith.constant 0 : index
    %2 = vector.load %arg3[%c0_1, %c0_2] : memref<64x128xbf16, #tpu.memory_space<vmem>>, vector<64x128xbf16>
    %cst = arith.constant dense<0.000000e+00> : vector<256x128xf32>
    %3 = tpu.matmul %1, %2, %cst {dimension_numbers = #tpu.dot_dimension_numbers<[1], [0], [0], [1], [0, 0, 1, 1], [], []>} : vector<256x64xbf16>, vector<64x128xbf16>, vector<256x128xf32> -> vector<256x128xf32>
    %c0_3 = arith.constant 0 : index
    %c0_4 = arith.constant 0 : index
    %4 = vector.load %arg4[%c0_3, %c0_4] : memref<1x128xf32, #tpu.memory_space<vmem>>, vector<1x128xf32>
    %5 = vector.broadcast %4 : vector<1x128xf32> to vector<256x128xf32>
    %6 = arith.addf %3, %5 : vector<256x128xf32>
    %cst_5 = arith.constant 0.000000e+00 : f32
    %7 = vector.broadcast %cst_5 : f32 to vector<256x128xf32>
    %8 = arith.maximumf %6, %7 : vector<256x128xf32>
    %9 = arith.truncf %8 : vector<256x128xf32> to vector<256x128xbf16>
    %c0_6 = arith.constant 0 : index
    %c0_7 = arith.constant 0 : index
    %10 = vector.load %arg5[%c0_6, %c0_7] : memref<128x128xbf16, #tpu.memory_space<vmem>>, vector<128x128xbf16>
    %cst_8 = arith.constant dense<0.000000e+00> : vector<256x128xf32>
    %11 = tpu.matmul %9, %10, %cst_8 {dimension_numbers = #tpu.dot_dimension_numbers<[1], [0], [0], [1], [0, 0, 1, 1], [], []>} : vector<256x128xbf16>, vector<128x128xbf16>, vector<256x128xf32> -> vector<256x128xf32>
    %c0_i32 = arith.constant 0 : i32
    %12 = arith.cmpi eq, %arg1, %c0_i32 : i32
    %13 = arith.extui %12 : i1 to i32
    %c0_i32_9 = arith.constant 0 : i32
    %14 = arith.cmpi ne, %13, %c0_i32_9 : i32
    scf.if %14 {
      %c0_12 = arith.constant 0 : index
      %c0_13 = arith.constant 0 : index
      %18 = vector.load %arg6[%c0_12, %c0_13] : memref<1x128xf32, #tpu.memory_space<vmem>>, vector<1x128xf32>
      %19 = vector.broadcast %18 : vector<1x128xf32> to vector<256x128xf32>
      %20 = arith.addf %11, %19 : vector<256x128xf32>
      %c0_14 = arith.constant 0 : index
      %c0_15 = arith.constant 0 : index
      %21 = vector.load %arg7[%c0_14, %c0_15] : memref<256x128xf32, #tpu.memory_space<vmem>>, vector<256x128xf32>
      tpu.vector_store %arg7[%c0_14, %c0_15], %20 {strides = array<i32>} : memref<256x128xf32, #tpu.memory_space<vmem>>, vector<256x128xf32>,
    } else {
    }
    %c0_i32_10 = arith.constant 0 : i32
    %15 = arith.cmpi sgt, %arg1, %c0_i32_10 : i32
    %16 = arith.extui %15 : i1 to i32
    %c0_i32_11 = arith.constant 0 : i32
    %17 = arith.cmpi ne, %16, %c0_i32_11 : i32
    scf.if %17 {
      %c0_12 = arith.constant 0 : index
      %c0_13 = arith.constant 0 : index
      %18 = vector.load %arg7[%c0_12, %c0_13] : memref<256x128xf32, #tpu.memory_space<vmem>>, vector<256x128xf32>
      %19 = arith.addf %18, %11 : vector<256x128xf32>
      %c0_14 = arith.constant 0 : index
      %c0_15 = arith.constant 0 : index
      %20 = vector.load %arg7[%c0_14, %c0_15] : memref<256x128xf32, #tpu.memory_space<vmem>>, vector<256x128xf32>
      tpu.vector_store %arg7[%c0_14, %c0_15], %19 {strides = array<i32>} : memref<256x128xf32, #tpu.memory_space<vmem>>, vector<256x128xf32>,
    } else {
    }
    return
  }
  func.func @transform_0(%arg0: i32, %arg1: i32) -> (i32, i32) {
    %c0_i32 = arith.constant 0 : i32
    %c0_i32_0 = arith.constant 0 : i32
    return %arg0, %c0_i32 : i32, i32
  }
  func.func @transform_1(%arg0: i32, %arg1: i32) -> (i32, i32) {
    %c0_i32 = arith.constant 0 : i32
    %c0_i32_0 = arith.constant 0 : i32
    return %c0_i32, %arg1 : i32, i32
  }
  func.func @transform_2(%arg0: i32, %arg1: i32) -> (i32, i32) {
    %c0_i32 = arith.constant 0 : i32
    %c0_i32_0 = arith.constant 0 : i32
    return %c0_i32, %arg1 : i32, i32
  }
  func.func @transform_3(%arg0: i32, %arg1: i32) -> (i32, i32) {
    %c0_i32 = arith.constant 0 : i32
    %c0_i32_0 = arith.constant 0 : i32
    return %arg1, %c0_i32 : i32, i32
  }
  func.func @transform_4(%arg0: i32, %arg1: i32) -> (i32, i32) {
    %c0_i32 = arith.constant 0 : i32
    %c0_i32_0 = arith.constant 0 : i32
    %c0_i32_1 = arith.constant 0 : i32
    return %c0_i32, %c0_i32_0 : i32, i32
  }
  func.func @transform_5(%arg0: i32, %arg1: i32) -> (i32, i32) {
    %c0_i32 = arith.constant 0 : i32
    %c0_i32_0 = arith.constant 0 : i32
    return %arg0, %c0_i32 : i32, i32
  }
}

</mosaic_0001>

<llo_original>
// kernel: tpu_custom_call.1
$region0: #{tpu_custom_call.1}
  #allocation0 [shape = 'u32[]', space=smem, size = 0x4, offset = 0x4, fixed_abs, tag = 'smem constant byte address 0x4 - core index']
  #allocation1 [shape = 'u32[72,128]{1,0:T(1,128)}', space=vmem, size = 0x9000, scoped, tag = 'internal scratch']
  %s0 = inlined_call_operand.vmem [shape: f32[512,64], index: 0, kind: input, shape index: {}]
  %s1 = inlined_call_operand.vmem [shape: bf16[64,128], index: 1, kind: input, shape index: {}]
  %s2 = inlined_call_operand.vmem [shape: f32[1,128], index: 2, kind: input, shape index: {}]
  %s3 = inlined_call_operand.vmem [shape: bf16[128,128], index: 3, kind: input, shape index: {}]
  %s4 = inlined_call_operand.vmem [shape: f32[1,128], index: 4, kind: input, shape index: {}]
  %s5 = inlined_call_operand.hbm [shape: f32[512,128], index: 5, kind: output, shape index: {}]
  %s6 = sld [smem:[#allocation0]]
  $region61: #{tpu_custom_call.1} parent=0
    _
  %s8 = ssub.s32 1, %s6
  %s9 = scalar_select 0, %s8, %s6
  $region1: #{tpu_custom_call.1} parent=0
    #allocation2 [shape = 'u8[262144]{0}', space=vmem, size = 0x40000, scoped, tag = 'output window, operand 0']
    #allocation3 [shape = 's32[2]{0}', space=sflag, size = 0x8, scoped, tag = 'scoped memory for tpu_custom_call.1']
    %10 = vsyncpa [#allocation3], 0
    %s11 = scalar_lea.sflag [#allocation3], 1
    %12 = vsyncpa %s11, 0
    loop: start=0, step=1, limit=4
    $region2: #{tpu_custom_call.1} parent=1 // loop_pre_header
      _
    $region3: #{tpu_custom_call.1} parent=1 // loop_header
      %s14 = sphi 0, %s18
      %p15 = scmp.ge.s32.totalorder %s14, 4
      %s21 = sphi 0, %s33
      %s22 = sphi 0, %s29
      %s23 = sphi 0, %s21
      %s24 = sphi 0, %s22
      %s25 = sphi 0, %s23
      %s26 = sphi 0, %s24
      %s36 = sphi 0, %s38
      %s39 = sphi 0, %s36
      %s40 = sphi 0, %s39
      %s56 = sphi 0, %s40
      %s62 = sphi 0, %s64
      %s65 = sphi 0, %s62
      %s66 = sphi 0, %s65
      %s82 = sphi 0, %s66
      %s88 = sphi 0, %s90
      %s91 = sphi 0, %s88
      %s92 = sphi 0, %s91
      %s108 = sphi 0, %s92
      %s114 = sphi 0, %s116
      %s117 = sphi 0, %s114
      %s118 = sphi 0, %s117
      %s134 = sphi 0, %s118
      %s138 = sphi 0, %s138
      %s140 = sphi 0, %s138
      %s141 = sphi 0, %s140
      %s155 = sphi 0, %s141
      %s161 = sphi 0, %s163
      %s164 = sphi 0, %s161
      %s165 = sphi 0, %s164
      %s181 = sphi 0, %s165
    $region4: #{tpu_custom_call.1} parent=1 // loop_header_branch
      %17 = sbr.rel (%p15) target = $region8
    $region5: #{tpu_custom_call.1} parent=1 // loop_body
      %s19 = ssub.s32 %s14, 1
      %s20 = ssub.s32 %s14, 2
      %s27 = sadd.s32 1, %s22
      %p28 = scmp.ge.s32.totalorder %s27, 1
      %s29 = scalar_select %p28, 0, %s27
      %s30 = sadd.s32 1, %s21
      %s31 = scalar_select %p28, %s30, %s21
      %p32 = scmp.ge.s32.totalorder %s31, 2
      %s33 = scalar_select %p32, 0, %s31
      %s34 = ssub.s32 %s21, %s33
      %p35 = scmp.eq.s32.totalorder %s34, 0
      %s37 = sadd.s32 %s36, 1
      %s38 = scalar_select %p35, %s36, %s37
      %p41 = pneg %p35
      %p42 = scmp.eq.s32.totalorder %s14, 1
      %p43 = por %p41, %p42
      %p44 = scmp.ne.s32.totalorder %s36, %s39
      %p45 = scmp.eq.s32.totalorder %s14, 0
      %p46 = por %p44, %p45
      %p47 = scmp.ne.s32.totalorder %s36, %s39
      %p48 = scmp.eq.s32.totalorder %s19, 1
      %p49 = por %p47, %p48
      %p50 = scmp.ne.s32.totalorder %s39, %s40
      %p51 = scmp.eq.s32.totalorder %s19, 0
      %p52 = por %p50, %p51
      %p53 = scmp.ne.s32.totalorder %s39, %s40
      %p54 = scmp.eq.s32.totalorder %s20, 1
      %p55 = por %p53, %p54
      %p57 = scmp.ne.s32.totalorder %s40, %s56
      %p58 = scmp.eq.s32.totalorder %s20, 0
      %p59 = por %p57, %p58
      %s60 = ssub.s32 %s22, %s29
      %p61 = scmp.eq.s32.totalorder %s60, 0
      %s63 = sadd.s32 %s62, 1
      %s64 = scalar_select %p61, %s62, %s63
      %p67 = pneg %p61
      %p68 = scmp.eq.s32.totalorder %s14, 1
      %p69 = por %p67, %p68
      %p70 = scmp.ne.s32.totalorder %s62, %s65
      %p71 = scmp.eq.s32.totalorder %s14, 0
      %p72 = por %p70, %p71
      %p73 = scmp.ne.s32.totalorder %s62, %s65
      %p74 = scmp.eq.s32.totalorder %s19, 1
      %p75 = por %p73, %p74
      %p76 = scmp.ne.s32.totalorder %s65, %s66
      %p77 = scmp.eq.s32.totalorder %s19, 0
      %p78 = por %p76, %p77
      %p79 = scmp.ne.s32.totalorder %s65, %s66
      %p80 = scmp.eq.s32.totalorder %s20, 1
      %p81 = por %p79, %p80
      %p83 = scmp.ne.s32.totalorder %s66, %s82
      %p84 = scmp.eq.s32.totalorder %s20, 0
      %p85 = por %p83, %p84
      %s86 = ssub.s32 %s22, %s29
      %p87 = scmp.eq.s32.totalorder %s86, 0
      %s89 = sadd.s32 %s88, 1
      %s90 = scalar_select %p87, %s88, %s89
      %p93 = pneg %p87
      %p94 = scmp.eq.s32.totalorder %s14, 1
      %p95 = por %p93, %p94
      %p96 = scmp.ne.s32.totalorder %s88, %s91
      %p97 = scmp.eq.s32.totalorder %s14, 0
      %p98 = por %p96, %p97
      %p99 = scmp.ne.s32.totalorder %s88, %s91
      %p100 = scmp.eq.s32.totalorder %s19, 1
      %p101 = por %p99, %p100
      %p102 = scmp.ne.s32.totalorder %s91, %s92
      %p103 = scmp.eq.s32.totalorder %s19, 0
      %p104 = por %p102, %p103
      %p105 = scmp.ne.s32.totalorder %s91, %s92
      %p106 = scmp.eq.s32.totalorder %s20, 1
      %p107 = por %p105, %p106
      %p109 = scmp.ne.s32.totalorder %s92, %s108
      %p110 = scmp.eq.s32.totalorder %s20, 0
      %p111 = por %p109, %p110
      %s112 = ssub.s32 %s22, %s29
      %p113 = scmp.eq.s32.totalorder %s112, 0
      %s115 = sadd.s32 %s114, 1
      %s116 = scalar_select %p113, %s114, %s115
      %p119 = pneg %p113
      %p120 = scmp.eq.s32.totalorder %s14, 1
      %p121 = por %p119, %p120
      %p122 = scmp.ne.s32.totalorder %s114, %s117
      %p123 = scmp.eq.s32.totalorder %s14, 0
      %p124 = por %p122, %p123
      %p125 = scmp.ne.s32.totalorder %s114, %s117
      %p126 = scmp.eq.s32.totalorder %s19, 1
      %p127 = por %p125, %p126
      %p128 = scmp.ne.s32.totalorder %s117, %s118
      %p129 = scmp.eq.s32.totalorder %s19, 0
      %p130 = por %p128, %p129
      %p131 = scmp.ne.s32.totalorder %s117, %s118
      %p132 = scmp.eq.s32.totalorder %s20, 1
      %p133 = por %p131, %p132
      %p135 = scmp.ne.s32.totalorder %s118, %s134
      %p136 = scmp.eq.s32.totalorder %s20, 0
      %p137 = por %p135, %p136
      %s139 = sadd.s32 %s138, 1
      %p142 = scmp.eq.s32.totalorder %s14, 1
      %p143 = scmp.ne.s32.totalorder %s138, %s140
      %p144 = scmp.eq.s32.totalorder %s14, 0
      %p145 = por %p143, %p144
      %p146 = scmp.ne.s32.totalorder %s138, %s140
      %p147 = scmp.eq.s32.totalorder %s19, 1
      %p148 = por %p146, %p147
      %p149 = scmp.ne.s32.totalorder %s140, %s141
      %p150 = scmp.eq.s32.totalorder %s19, 0
      %p151 = por %p149, %p150
      %p152 = scmp.ne.s32.totalorder %s140, %s141
      %p153 = scmp.eq.s32.totalorder %s20, 1
      %p154 = por %p152, %p153
      %p156 = scmp.ne.s32.totalorder %s141, %s155
      %p157 = scmp.eq.s32.totalorder %s20, 0
      %p158 = por %p156, %p157
      %s159 = ssub.s32 %s21, %s33
      %p160 = scmp.eq.s32.totalorder %s159, 0
      %s162 = sadd.s32 %s161, 1
      %s163 = scalar_select %p160, %s161, %s162
      %p166 = pneg %p160
      %p167 = scmp.eq.s32.totalorder %s14, 1
      %p168 = por %p166, %p167
      %p169 = scmp.ne.s32.totalorder %s161, %s164
      %p170 = scmp.eq.s32.totalorder %s14, 0
      %p171 = por %p169, %p170
      %p172 = scmp.ne.s32.totalorder %s161, %s164
      %p173 = scmp.eq.s32.totalorder %s19, 1
      %p174 = por %p172, %p173
      %p175 = scmp.ne.s32.totalorder %s164, %s165
      %p176 = scmp.eq.s32.totalorder %s19, 0
      %p177 = por %p175, %p176
      %p178 = scmp.ne.s32.totalorder %s164, %s165
      %p179 = scmp.eq.s32.totalorder %s20, 1
      %p180 = por %p178, %p179
      %p182 = scmp.ne.s32.totalorder %s165, %s181
      %p183 = scmp.eq.s32.totalorder %s20, 0
      %p184 = por %p182, %p183
      %p185 = scmp.le.s32.totalorder 1, %s14
      %p186 = scmp.lt.s32.totalorder %s14, 3
      %p187 = pnand %p185, %p186
      %p188 = pneg %p187
      // Predicated region
      $region9: #{tpu_custom_call.1} parent=5 // pred_check
        _
      $region10: #{tpu_custom_call.1} parent=5 // pred_check_branch
        %190 = sbr.rel (%p187) target = $region12
      $region11: #{tpu_custom_call.1} parent=5 // pred_region
        %s191 = ssub.s32 %s14, 1
        // Predicated region
        $region13: #{tpu_custom_call.1} parent=11 // pred_check
          %p192 = pneg %p78
        $region14: #{tpu_custom_call.1} parent=11 // pred_check_branch
          %194 = sbr.rel (%p192) target = $region16
        $region15: #{tpu_custom_call.1} parent=11 // pred_region
          %p195 = scmp.lt.s32.totalorder %s24, 0
          %s196 = scalar_select %p195, %s24, 0
          %s197 = smul.addr %s196, 4
          %s198 = scalar_lea.vmem %s1, %s197
        $region16: #{tpu_custom_call.1} parent=11 // pred_fallthru
          _
        // Predicated region
        $region17: #{tpu_custom_call.1} parent=11 // pred_check
          %p199 = pneg %p104
        $region18: #{tpu_custom_call.1} parent=11 // pred_check_branch
          %201 = sbr.rel (%p199) target = $region20
        $region19: #{tpu_custom_call.1} parent=11 // pred_region
          %p202 = scmp.lt.s32.totalorder %s24, 0
          %s203 = scalar_select %p202, %s24, 0
          %s204 = scalar_lea.vmem %s2, %s203
        $region20: #{tpu_custom_call.1} parent=11 // pred_fallthru
          _
        // Predicated region
        $region21: #{tpu_custom_call.1} parent=11 // pred_check
          %p205 = pneg %p130
        $region22: #{tpu_custom_call.1} parent=11 // pred_check_branch
          %207 = sbr.rel (%p205) target = $region24
        $region23: #{tpu_custom_call.1} parent=11 // pred_region
          %s208 = smul.u32 16, %s24
          %p209 = scmp.lt.s32.totalorder %s208, 15
          %s210 = scalar_select %p209, %s208, 15
          %s211 = smul.addr %s210, 4
          %s212 = scalar_lea.vmem %s3, %s211
          %s213 = smul.u32 16, %s24
        $region24: #{tpu_custom_call.1} parent=11 // pred_fallthru
          _
        // Predicated region
        $region25: #{tpu_custom_call.1} parent=11 // pred_check
          %p214 = pneg %p151
        $region26: #{tpu_custom_call.1} parent=11 // pred_check_branch
          %216 = sbr.rel (%p214) target = $region28
        $region27: #{tpu_custom_call.1} parent=11 // pred_region
          _
        $region28: #{tpu_custom_call.1} parent=11 // pred_fallthru
          _
      $region12: #{tpu_custom_call.1} parent=5 // pred_fallthru
        _
      %p217 = scmp.lt.s32.totalorder %s14, 2
      // Predicated region
      $region29: #{tpu_custom_call.1} parent=5 // pred_check
        %p218 = pneg %p217
      $region30: #{tpu_custom_call.1} parent=5 // pred_check_branch
        %220 = sbr.rel (%p218) target = $region32
      $region31: #{tpu_custom_call.1} parent=5 // pred_region
        // Predicated region
        $region33: #{tpu_custom_call.1} parent=31 // pred_check
          %p221 = pneg %p46
        $region34: #{tpu_custom_call.1} parent=31 // pred_check_branch
          %223 = sbr.rel (%p221) target = $region36
        $region35: #{tpu_custom_call.1} parent=31 // pred_region
          %s224 = smul.u32 32, %s21
          %p225 = scmp.lt.s32.totalorder %s224, 63
          %s226 = scalar_select %p225, %s224, 63
          %s227 = smul.addr %s226, 8
          %s228 = scalar_lea.vmem %s0, %s227
          %s229 = smul.u32 32, %s21
        $region36: #{tpu_custom_call.1} parent=31 // pred_fallthru
          _
      $region32: #{tpu_custom_call.1} parent=5 // pred_fallthru
        _
      %p230 = scmp.le.s32.totalorder 1, %s14
      %p231 = scmp.lt.s32.totalorder %s14, 3
      %p232 = pnand %p230, %p231
      %p233 = pneg %p232
      // Predicated region
      $region37: #{tpu_custom_call.1} parent=5 // pred_check
        _
      $region38: #{tpu_custom_call.1} parent=5 // pred_check_branch
        %235 = sbr.rel (%p232) target = $region40
      $region39: #{tpu_custom_call.1} parent=5 // pred_region
        %s236 = ssub.s32 %s14, 1
        %s237 = smul.u32 32, %s23
        %p238 = scmp.lt.s32.totalorder %s237, 63
        %s239 = scalar_select %p238, %s237, 63
        %s240 = smul.addr %s239, 8
        %s241 = scalar_lea.vmem %s0, %s240
        %p242 = pneg %p52
        %p243 = pneg %p49
        %p244 = scmp.lt.s32.totalorder %s24, 0
        %s245 = scalar_select %p244, %s24, 0
        %s246 = smul.addr %s245, 4
        %s247 = scalar_lea.vmem %s1, %s246
        %p248 = pneg %p78
        %p249 = pneg %p75
        %p250 = scmp.lt.s32.totalorder %s24, 0
        %s251 = scalar_select %p250, %s24, 0
        %s252 = scalar_lea.vmem %s2, %s251
        %p253 = pneg %p104
        %p254 = pneg %p101
        %s255 = smul.u32 16, %s24
        %p256 = scmp.lt.s32.totalorder %s255, 15
        %s257 = scalar_select %p256, %s255, 15
        %s258 = smul.addr %s257, 4
        %s259 = scalar_lea.vmem %s3, %s258
        %p260 = pneg %p130
        %p261 = pneg %p127
        %p262 = pneg %p151
        %p263 = pneg %p148
        %p264 = pneg %p177
        %p265 = pneg %p174
        %s266 = sand.u32 %s164, 1
        %s267 = scalar_lea.sflag [#allocation3], %s266
        %s268 = sand.u32 %s164, 1
        %s269 = smul.addr %s268, 256
        %s270 = scalar_lea.vmem [#allocation2], %s269
        %s271 = smul.u32 32, %s23
        %p272 = scmp.lt.s32.totalorder %s271, 63
        %s273 = scalar_select %p272, %s271, 63
        %s274 = smul.addr %s273, 8
        %s275 = scalar_lea.vmem %s0, %s274
        %s276 = smul.u32 32, %s23
        %p277 = scmp.lt.s32.totalorder %s24, 0
        %s278 = scalar_select %p277, %s24, 0
        %s279 = smul.addr %s278, 4
        %s280 = scalar_lea.vmem %s1, %s279
        %p281 = scmp.lt.s32.totalorder %s24, 0
        %s282 = scalar_select %p281, %s24, 0
        %s283 = scalar_lea.vmem %s2, %s282
        %s284 = smul.u32 16, %s24
        %p285 = scmp.lt.s32.totalorder %s284, 15
        %s286 = scalar_select %p285, %s284, 15
        %s287 = smul.addr %s286, 4
        %s288 = scalar_lea.vmem %s3, %s287
        %s289 = smul.u32 16, %s24
        %s290 = smul.u32 32, %s23
        %v292 = vld [vmem:[%s275] sm:$0xff]
        %v293 = vld [vmem:[%s275 + $0x8] sm:$0xff]
        %v294 = vld [vmem:[%s275 + $0x10] sm:$0xff]
        %v295 = vld [vmem:[%s275 + $0x18] sm:$0xff]
        %v296 = vld [vmem:[%s275 + $0x20] sm:$0xff]
        %v297 = vld [vmem:[%s275 + $0x28] sm:$0xff]
        %v298 = vld [vmem:[%s275 + $0x30] sm:$0xff]
        %v299 = vld [vmem:[%s275 + $0x38] sm:$0xff]
        %v300 = vld [vmem:[%s275 + $0x40] sm:$0xff]
        %v301 = vld [vmem:[%s275 + $0x48] sm:$0xff]
        %v302 = vld [vmem:[%s275 + $0x50] sm:$0xff]
        %v303 = vld [vmem:[%s275 + $0x58] sm:$0xff]
        %v304 = vld [vmem:[%s275 + $0x60] sm:$0xff]
        %v305 = vld [vmem:[%s275 + $0x68] sm:$0xff]
        %v306 = vld [vmem:[%s275 + $0x70] sm:$0xff]
        %v307 = vld [vmem:[%s275 + $0x78] sm:$0xff]
        %v308 = vld [vmem:[%s275 + $0x80] sm:$0xff]
        %v309 = vld [vmem:[%s275 + $0x88] sm:$0xff]
        %v310 = vld [vmem:[%s275 + $0x90] sm:$0xff]
        %v311 = vld [vmem:[%s275 + $0x98] sm:$0xff]
        %v312 = vld [vmem:[%s275 + $0xa0] sm:$0xff]
        %v313 = vld [vmem:[%s275 + $0xa8] sm:$0xff]
        %v314 = vld [vmem:[%s275 + $0xb0] sm:$0xff]
        %v315 = vld [vmem:[%s275 + $0xb8] sm:$0xff]
        %v316 = vld [vmem:[%s275 + $0xc0] sm:$0xff]
        %v317 = vld [vmem:[%s275 + $0xc8] sm:$0xff]
        %v318 = vld [vmem:[%s275 + $0xd0] sm:$0xff]
        %v319 = vld [vmem:[%s275 + $0xd8] sm:$0xff]
        %v320 = vld [vmem:[%s275 + $0xe0] sm:$0xff]
        %v321 = vld [vmem:[%s275 + $0xe8] sm:$0xff]
        %v322 = vld [vmem:[%s275 + $0xf0] sm:$0xff]
        %v323 = vld [vmem:[%s275 + $0xf8] sm:$0xff]
        %v324 = vpack.c.bf16 %v293, %v292
        %v325 = vpack.c.bf16 %v295, %v294
        %v326 = vpack.c.bf16 %v297, %v296
        %v327 = vpack.c.bf16 %v299, %v298
        %v328 = vpack.c.bf16 %v301, %v300
        %v329 = vpack.c.bf16 %v303, %v302
        %v330 = vpack.c.bf16 %v305, %v304
        %v331 = vpack.c.bf16 %v307, %v306
        %v332 = vpack.c.bf16 %v309, %v308
        %v333 = vpack.c.bf16 %v311, %v310
        %v334 = vpack.c.bf16 %v313, %v312
        %v335 = vpack.c.bf16 %v315, %v314
        %v336 = vpack.c.bf16 %v317, %v316
        %v337 = vpack.c.bf16 %v319, %v318
        %v338 = vpack.c.bf16 %v321, %v320
        %v339 = vpack.c.bf16 %v323, %v322
        %v340 = vld [vmem:[%s280] sm:$0xf]
        %v341 = vld [vmem:[%s280 + $0x4] sm:$0xf]
        %v342 = vld [vmem:[%s280 + $0x8] sm:$0xf]
        %v343 = vld [vmem:[%s280 + $0xc] sm:$0xf]
        %v344 = vld [vmem:[%s280 + $0x10] sm:$0xf]
        %v345 = vld [vmem:[%s280 + $0x14] sm:$0xf]
        %v346 = vld [vmem:[%s280 + $0x18] sm:$0xf]
        %v347 = vld [vmem:[%s280 + $0x1c] sm:$0xf]
        %v348 = vld [vmem:[%s283] sm:$0x1]
        %v350 = vperm.slane %v348, 0
        %v360 = vunpack.c.l.b16 %v340
        %v361 = vunpack.c.l.b16 %v341
        %v362 = vunpack.c.l.b16 %v342
        %v363 = vunpack.c.l.b16 %v343
        %v364 = vunpack.c.l.b16 %v344
        %v365 = vunpack.c.l.b16 %v345
        %v366 = vunpack.c.l.b16 %v346
        %v367 = vunpack.c.l.b16 %v347
        %v368 = vpack.c.b16 %v361, %v360
        %v369 = vpack.c.b16 %v363, %v362
        %v370 = vpack.c.b16 %v365, %v364
        %v371 = vpack.c.b16 %v367, %v366
        %vm376 = vcmask 523264
        %v378 = vsel %vm376, %v324, 0
        %v381 = vsel %vm376, %v325, 0
        %v384 = vsel %vm376, %v326, 0
        %v387 = vsel %vm376, %v327, 0
        %v390 = vsel %vm376, %v328, 0
        %v393 = vsel %vm376, %v329, 0
        %v396 = vsel %vm376, %v330, 0
        %v399 = vsel %vm376, %v331, 0
        %v402 = vsel %vm376, %v332, 0
        %v405 = vsel %vm376, %v333, 0
        %v408 = vsel %vm376, %v334, 0
        %v411 = vsel %vm376, %v335, 0
        %v414 = vsel %vm376, %v336, 0
        %v417 = vsel %vm376, %v337, 0
        %v420 = vsel %vm376, %v338, 0
        %v423 = vsel %vm376, %v339, 0
        %425 = vmatpush.bf16.msra.mxu0 0
        %426 = vmatpush.bf16.msra.mxu0 0
        %427 = vmatpush.bf16.msra.mxu0 0
        %428 = vmatpush.bf16.msra.mxu0 0
        %429 = vmatpush.bf16.msra.mxu0 %v371
        %430 = vmatpush.bf16.msra.mxu0 %v370
        %431 = vmatpush.bf16.msra.mxu0 %v369
        %432 = vmatpush.bf16.msra.mxu0 %v368
        %433 = vmatmul.bf16.gmra.mxu0 %v378
        %v434 = vpop.f32.mrf.mxu0
        %v435 = vadd.f32 %v350, %v434
        %v436 = vpop.f32.mrf.mxu0
        %v437 = vadd.f32 %v350, %v436
        %438 = vmatmul.bf16.gmra.mxu0 %v381
        %v439 = vpop.f32.mrf.mxu0
        %v440 = vadd.f32 %v350, %v439
        %v441 = vpop.f32.mrf.mxu0
        %v442 = vadd.f32 %v350, %v441
        %443 = vmatmul.bf16.gmra.mxu0 %v384
        %v444 = vpop.f32.mrf.mxu0
        %v445 = vadd.f32 %v350, %v444
        %v446 = vpop.f32.mrf.mxu0
        %v447 = vadd.f32 %v350, %v446
        %448 = vmatmul.bf16.gmra.mxu0 %v387
        %v449 = vpop.f32.mrf.mxu0
        %v450 = vadd.f32 %v350, %v449
        %v451 = vpop.f32.mrf.mxu0
        %v452 = vadd.f32 %v350, %v451
        %453 = vmatmul.bf16.gmra.mxu0 %v390
        %v454 = vpop.f32.mrf.mxu0
        %v455 = vadd.f32 %v350, %v454
        %v456 = vpop.f32.mrf.mxu0
        %v457 = vadd.f32 %v350, %v456
        %458 = vmatmul.bf16.gmra.mxu0 %v393
        %v459 = vpop.f32.mrf.mxu0
        %v460 = vadd.f32 %v350, %v459
        %v461 = vpop.f32.mrf.mxu0
        %v462 = vadd.f32 %v350, %v461
        %463 = vmatmul.bf16.gmra.mxu0 %v396
        %v464 = vpop.f32.mrf.mxu0
        %v465 = vadd.f32 %v350, %v464
        %v466 = vpop.f32.mrf.mxu0
        %v467 = vadd.f32 %v350, %v466
        %468 = vmatmul.bf16.gmra.mxu0 %v399
        %v469 = vpop.f32.mrf.mxu0
        %v470 = vadd.f32 %v350, %v469
        %v471 = vpop.f32.mrf.mxu0
        %v472 = vadd.f32 %v350, %v471
        %473 = vmatmul.bf16.gmra.mxu0 %v402
        %v474 = vpop.f32.mrf.mxu0
        %v475 = vadd.f32 %v350, %v474
        %v476 = vpop.f32.mrf.mxu0
        %v477 = vadd.f32 %v350, %v476
        %478 = vmatmul.bf16.gmra.mxu0 %v405
        %v479 = vpop.f32.mrf.mxu0
        %v480 = vadd.f32 %v350, %v479
        %v481 = vpop.f32.mrf.mxu0
        %v482 = vadd.f32 %v350, %v481
        %483 = vmatmul.bf16.gmra.mxu0 %v408
        %v484 = vpop.f32.mrf.mxu0
        %v485 = vadd.f32 %v350, %v484
        %v486 = vpop.f32.mrf.mxu0
        %v487 = vadd.f32 %v350, %v486
        %488 = vmatmul.bf16.gmra.mxu0 %v411
        %v489 = vpop.f32.mrf.mxu0
        %v490 = vadd.f32 %v350, %v489
        %v491 = vpop.f32.mrf.mxu0
        %v492 = vadd.f32 %v350, %v491
        %493 = vmatmul.bf16.gmra.mxu0 %v414
        %v494 = vpop.f32.mrf.mxu0
        %v495 = vadd.f32 %v350, %v494
        %v496 = vpop.f32.mrf.mxu0
        %v497 = vadd.f32 %v350, %v496
        %498 = vmatmul.bf16.gmra.mxu0 %v417
        %v499 = vpop.f32.mrf.mxu0
        %v500 = vadd.f32 %v350, %v499
        %v501 = vpop.f32.mrf.mxu0
        %v502 = vadd.f32 %v350, %v501
        %503 = vmatmul.bf16.gmra.mxu0 %v420
        %v504 = vpop.f32.mrf.mxu0
        %v505 = vadd.f32 %v350, %v504
        %v506 = vpop.f32.mrf.mxu0
        %v507 = vadd.f32 %v350, %v506
        %508 = vmatmul.bf16.gmra.mxu0 %v423
        %v509 = vpop.f32.mrf.mxu0
        %v510 = vadd.f32 %v350, %v509
        %v511 = vpop.f32.mrf.mxu0
        %v512 = vadd.f32 %v350, %v511
        %513 = vdwg.mxu0
        %v514 = vmax.f32 %v435, 0.0
        %v515 = vmax.f32 %v437, 0.0
        %v516 = vmax.f32 %v440, 0.0
        %v517 = vmax.f32 %v442, 0.0
        %v518 = vmax.f32 %v445, 0.0
        %v519 = vmax.f32 %v447, 0.0
        %v520 = vmax.f32 %v450, 0.0
        %v521 = vmax.f32 %v452, 0.0
        %v522 = vmax.f32 %v455, 0.0
        %v523 = vmax.f32 %v457, 0.0
        %v524 = vmax.f32 %v460, 0.0
        %v525 = vmax.f32 %v462, 0.0
        %v526 = vmax.f32 %v465, 0.0
        %v527 = vmax.f32 %v467, 0.0
        %v528 = vmax.f32 %v470, 0.0
        %v529 = vmax.f32 %v472, 0.0
        %v530 = vmax.f32 %v475, 0.0
        %v531 = vmax.f32 %v477, 0.0
        %v532 = vmax.f32 %v480, 0.0
        %v533 = vmax.f32 %v482, 0.0
        %v534 = vmax.f32 %v485, 0.0
        %v535 = vmax.f32 %v487, 0.0
        %v536 = vmax.f32 %v490, 0.0
        %v537 = vmax.f32 %v492, 0.0
        %v538 = vmax.f32 %v495, 0.0
        %v539 = vmax.f32 %v497, 0.0
        %v540 = vmax.f32 %v500, 0.0
        %v541 = vmax.f32 %v502, 0.0
        %v542 = vmax.f32 %v505, 0.0
        %v543 = vmax.f32 %v507, 0.0
        %v544 = vmax.f32 %v510, 0.0
        %v545 = vmax.f32 %v512, 0.0
        %v546 = vpack.c.bf16 %v515, %v514
        %v547 = vpack.c.bf16 %v517, %v516
        %v548 = vpack.c.bf16 %v519, %v518
        %v549 = vpack.c.bf16 %v521, %v520
        %v550 = vpack.c.bf16 %v523, %v522
        %v551 = vpack.c.bf16 %v525, %v524
        %v552 = vpack.c.bf16 %v527, %v526
        %v553 = vpack.c.bf16 %v529, %v528
        %v554 = vpack.c.bf16 %v531, %v530
        %v555 = vpack.c.bf16 %v533, %v532
        %v556 = vpack.c.bf16 %v535, %v534
        %v557 = vpack.c.bf16 %v537, %v536
        %v558 = vpack.c.bf16 %v539, %v538
        %v559 = vpack.c.bf16 %v541, %v540
        %v560 = vpack.c.bf16 %v543, %v542
        %v561 = vpack.c.bf16 %v545, %v544
        %v562 = vld [vmem:[%s288] sm:$0xf]
        %v563 = vld [vmem:[%s288 + $0x4] sm:$0xf]
        %v564 = vld [vmem:[%s288 + $0x8] sm:$0xf]
        %v565 = vld [vmem:[%s288 + $0xc] sm:$0xf]
        %v566 = vld [vmem:[%s288 + $0x10] sm:$0xf]
        %v567 = vld [vmem:[%s288 + $0x14] sm:$0xf]
        %v568 = vld [vmem:[%s288 + $0x18] sm:$0xf]
        %v569 = vld [vmem:[%s288 + $0x1c] sm:$0xf]
        %v570 = vld [vmem:[%s288 + $0x20] sm:$0xf]
        %v571 = vld [vmem:[%s288 + $0x24] sm:$0xf]
        %v572 = vld [vmem:[%s288 + $0x28] sm:$0xf]
        %v573 = vld [vmem:[%s288 + $0x2c] sm:$0xf]
        %v574 = vld [vmem:[%s288 + $0x30] sm:$0xf]
        %v575 = vld [vmem:[%s288 + $0x34] sm:$0xf]
        %v576 = vld [vmem:[%s288 + $0x38] sm:$0xf]
        %v577 = vld [vmem:[%s288 + $0x3c] sm:$0xf]
        %v594 = vunpack.c.l.b16 %v562
        %v595 = vunpack.c.l.b16 %v563
        %v596 = vunpack.c.l.b16 %v564
        %v597 = vunpack.c.l.b16 %v565
        %v598 = vunpack.c.l.b16 %v566
        %v599 = vunpack.c.l.b16 %v567
        %v600 = vunpack.c.l.b16 %v568
        %v601 = vunpack.c.l.b16 %v569
        %v602 = vunpack.c.l.b16 %v570
        %v603 = vunpack.c.l.b16 %v571
        %v604 = vunpack.c.l.b16 %v572
        %v605 = vunpack.c.l.b16 %v573
        %v606 = vunpack.c.l.b16 %v574
        %v607 = vunpack.c.l.b16 %v575
        %v608 = vunpack.c.l.b16 %v576
        %v609 = vunpack.c.l.b16 %v577
        %v610 = vpack.c.b16 %v595, %v594
        %v611 = vpack.c.b16 %v597, %v596
        %v612 = vpack.c.b16 %v599, %v598
        %v613 = vpack.c.b16 %v601, %v600
        %v614 = vpack.c.b16 %v603, %v602
        %v615 = vpack.c.b16 %v605, %v604
        %v616 = vpack.c.b16 %v607, %v606
        %v617 = vpack.c.b16 %v609, %v608
        %626 = vmatpush.bf16.msra.mxu0 %v617
        %627 = vmatpush.bf16.msra.mxu0 %v616
        %628 = vmatpush.bf16.msra.mxu0 %v615
        %629 = vmatpush.bf16.msra.mxu0 %v614
        %630 = vmatpush.bf16.msra.mxu0 %v613
        %631 = vmatpush.bf16.msra.mxu0 %v612
        %632 = vmatpush.bf16.msra.mxu0 %v611
        %633 = vmatpush.bf16.msra.mxu0 %v610
        %634 = vmatmul.bf16.gmra.mxu0 %v546
        %v635 = vpop.f32.mrf.mxu0
        %v636 = vadd.f32 0.0, %v635
        %v637 = vpop.f32.mrf.mxu0
        %v638 = vadd.f32 0.0, %v637
        %639 = vmatmul.bf16.gmra.mxu0 %v547
        %v640 = vpop.f32.mrf.mxu0
        %v641 = vadd.f32 0.0, %v640
        %v642 = vpop.f32.mrf.mxu0
        %v643 = vadd.f32 0.0, %v642
        %644 = vmatmul.bf16.gmra.mxu0 %v548
        %v645 = vpop.f32.mrf.mxu0
        %v646 = vadd.f32 0.0, %v645
        %v647 = vpop.f32.mrf.mxu0
        %v648 = vadd.f32 0.0, %v647
        %649 = vmatmul.bf16.gmra.mxu0 %v549
        %v650 = vpop.f32.mrf.mxu0
        %v651 = vadd.f32 0.0, %v650
        %v652 = vpop.f32.mrf.mxu0
        %v653 = vadd.f32 0.0, %v652
        %654 = vmatmul.bf16.gmra.mxu0 %v550
        %v655 = vpop.f32.mrf.mxu0
        %v656 = vadd.f32 0.0, %v655
        %v657 = vpop.f32.mrf.mxu0
        %v658 = vadd.f32 0.0, %v657
        %659 = vmatmul.bf16.gmra.mxu0 %v551
        %v660 = vpop.f32.mrf.mxu0
        %v661 = vadd.f32 0.0, %v660
        %v662 = vpop.f32.mrf.mxu0
        %v663 = vadd.f32 0.0, %v662
        %664 = vmatmul.bf16.gmra.mxu0 %v552
        %v665 = vpop.f32.mrf.mxu0
        %v666 = vadd.f32 0.0, %v665
        %v667 = vpop.f32.mrf.mxu0
        %v668 = vadd.f32 0.0, %v667
        %669 = vmatmul.bf16.gmra.mxu0 %v553
        %v670 = vpop.f32.mrf.mxu0
        %v671 = vadd.f32 0.0, %v670
        %v672 = vpop.f32.mrf.mxu0
        %v673 = vadd.f32 0.0, %v672
        %674 = vmatmul.bf16.gmra.mxu0 %v554
        %v675 = vpop.f32.mrf.mxu0
        %v676 = vadd.f32 0.0, %v675
        %v677 = vpop.f32.mrf.mxu0
        %v678 = vadd.f32 0.0, %v677
        %679 = vmatmul.bf16.gmra.mxu0 %v555
        %v680 = vpop.f32.mrf.mxu0
        %v681 = vadd.f32 0.0, %v680
        %v682 = vpop.f32.mrf.mxu0
        %v683 = vadd.f32 0.0, %v682
        %684 = vmatmul.bf16.gmra.mxu0 %v556
        %v685 = vpop.f32.mrf.mxu0
        %v686 = vadd.f32 0.0, %v685
        %v687 = vpop.f32.mrf.mxu0
        %v688 = vadd.f32 0.0, %v687
        %689 = vmatmul.bf16.gmra.mxu0 %v557
        %v690 = vpop.f32.mrf.mxu0
        %v691 = vadd.f32 0.0, %v690
        %v692 = vpop.f32.mrf.mxu0
        %v693 = vadd.f32 0.0, %v692
        %694 = vmatmul.bf16.gmra.mxu0 %v558
        %v695 = vpop.f32.mrf.mxu0
        %v696 = vadd.f32 0.0, %v695
        %v697 = vpop.f32.mrf.mxu0
        %v698 = vadd.f32 0.0, %v697
        %699 = vmatmul.bf16.gmra.mxu0 %v559
        %v700 = vpop.f32.mrf.mxu0
        %v701 = vadd.f32 0.0, %v700
        %v702 = vpop.f32.mrf.mxu0
        %v703 = vadd.f32 0.0, %v702
        %704 = vmatmul.bf16.gmra.mxu0 %v560
        %v705 = vpop.f32.mrf.mxu0
        %v706 = vadd.f32 0.0, %v705
        %v707 = vpop.f32.mrf.mxu0
        %v708 = vadd.f32 0.0, %v707
        %709 = vmatmul.bf16.gmra.mxu0 %v561
        %v710 = vpop.f32.mrf.mxu0
        %v711 = vadd.f32 0.0, %v710
        %v712 = vpop.f32.mrf.mxu0
        %v713 = vadd.f32 0.0, %v712
        %714 = vdwg.mxu0
        %p715 = scmp.eq.s32.totalorder %s24, 0
        // Predicated region
        $region41: #{tpu_custom_call.1} parent=39 // pred_check
          %p716 = pneg %p715
        $region42: #{tpu_custom_call.1} parent=39 // pred_check_branch
          %718 = sbr.rel (%p716) target = $region44
        $region43: #{tpu_custom_call.1} parent=39 // pred_region
          %v719 = vld [vmem:[%s4] sm:$0x1]
          %v721 = vperm.slane %v719, 0
          %v723 = vadd.f32 %v636, %v721
          %v724 = vadd.f32 %v638, %v721
          %v725 = vadd.f32 %v641, %v721
          %v726 = vadd.f32 %v643, %v721
          %v727 = vadd.f32 %v646, %v721
          %v728 = vadd.f32 %v648, %v721
          %v729 = vadd.f32 %v651, %v721
          %v730 = vadd.f32 %v653, %v721
          %v731 = vadd.f32 %v656, %v721
          %v732 = vadd.f32 %v658, %v721
          %v733 = vadd.f32 %v661, %v721
          %v734 = vadd.f32 %v663, %v721
          %v735 = vadd.f32 %v666, %v721
          %v736 = vadd.f32 %v668, %v721
          %v737 = vadd.f32 %v671, %v721
          %v738 = vadd.f32 %v673, %v721
          %v739 = vadd.f32 %v676, %v721
          %v740 = vadd.f32 %v678, %v721
          %v741 = vadd.f32 %v681, %v721
          %v742 = vadd.f32 %v683, %v721
          %v743 = vadd.f32 %v686, %v721
          %v744 = vadd.f32 %v688, %v721
          %v745 = vadd.f32 %v691, %v721
          %v746 = vadd.f32 %v693, %v721
          %v747 = vadd.f32 %v696, %v721
          %v748 = vadd.f32 %v698, %v721
          %v749 = vadd.f32 %v701, %v721
          %v750 = vadd.f32 %v703, %v721
          %v751 = vadd.f32 %v706, %v721
          %v752 = vadd.f32 %v708, %v721
          %v753 = vadd.f32 %v711, %v721
          %v754 = vadd.f32 %v713, %v721
          %755 = vst [vmem:[%s270] sm:$0xff] %v723
          %756 = vst [vmem:[%s270 + $0x8] sm:$0xff] %v724
          %757 = vst [vmem:[%s270 + $0x10] sm:$0xff] %v725
          %758 = vst [vmem:[%s270 + $0x18] sm:$0xff] %v726
          %759 = vst [vmem:[%s270 + $0x20] sm:$0xff] %v727
          %760 = vst [vmem:[%s270 + $0x28] sm:$0xff] %v728
          %761 = vst [vmem:[%s270 + $0x30] sm:$0xff] %v729
          %762 = vst [vmem:[%s270 + $0x38] sm:$0xff] %v730
          %763 = vst [vmem:[%s270 + $0x40] sm:$0xff] %v731
          %764 = vst [vmem:[%s270 + $0x48] sm:$0xff] %v732
          %765 = vst [vmem:[%s270 + $0x50] sm:$0xff] %v733
          %766 = vst [vmem:[%s270 + $0x58] sm:$0xff] %v734
          %767 = vst [vmem:[%s270 + $0x60] sm:$0xff] %v735
          %768 = vst [vmem:[%s270 + $0x68] sm:$0xff] %v736
          %769 = vst [vmem:[%s270 + $0x70] sm:$0xff] %v737
          %770 = vst [vmem:[%s270 + $0x78] sm:$0xff] %v738
          %771 = vst [vmem:[%s270 + $0x80] sm:$0xff] %v739
          %772 = vst [vmem:[%s270 + $0x88] sm:$0xff] %v740
          %773 = vst [vmem:[%s270 + $0x90] sm:$0xff] %v741
          %774 = vst [vmem:[%s270 + $0x98] sm:$0xff] %v742
          %775 = vst [vmem:[%s270 + $0xa0] sm:$0xff] %v743
          %776 = vst [vmem:[%s270 + $0xa8] sm:$0xff] %v744
          %777 = vst [vmem:[%s270 + $0xb0] sm:$0xff] %v745
          %778 = vst [vmem:[%s270 + $0xb8] sm:$0xff] %v746
          %779 = vst [vmem:[%s270 + $0xc0] sm:$0xff] %v747
          %780 = vst [vmem:[%s270 + $0xc8] sm:$0xff] %v748
          %781 = vst [vmem:[%s270 + $0xd0] sm:$0xff] %v749
          %782 = vst [vmem:[%s270 + $0xd8] sm:$0xff] %v750
          %783 = vst [vmem:[%s270 + $0xe0] sm:$0xff] %v751
          %784 = vst [vmem:[%s270 + $0xe8] sm:$0xff] %v752
          %785 = vst [vmem:[%s270 + $0xf0] sm:$0xff] %v753
          %786 = vst [vmem:[%s270 + $0xf8] sm:$0xff] %v754
        $region44: #{tpu_custom_call.1} parent=39 // pred_fallthru
          _
        %p787 = scmp.gt.s32.totalorder %s24, 0
        // Predicated region
        $region45: #{tpu_custom_call.1} parent=39 // pred_check
          %p788 = pneg %p787
        $region46: #{tpu_custom_call.1} parent=39 // pred_check_branch
          %790 = sbr.rel (%p788) target = $region48
        $region47: #{tpu_custom_call.1} parent=39 // pred_region
          %v791 = vld [vmem:[%s270] sm:$0xff]
          %v792 = vld [vmem:[%s270 + $0x8] sm:$0xff]
          %v793 = vld [vmem:[%s270 + $0x10] sm:$0xff]
          %v794 = vld [vmem:[%s270 + $0x18] sm:$0xff]
          %v795 = vld [vmem:[%s270 + $0x20] sm:$0xff]
          %v796 = vld [vmem:[%s270 + $0x28] sm:$0xff]
          %v797 = vld [vmem:[%s270 + $0x30] sm:$0xff]
          %v798 = vld [vmem:[%s270 + $0x38] sm:$0xff]
          %v799 = vld [vmem:[%s270 + $0x40] sm:$0xff]
          %v800 = vld [vmem:[%s270 + $0x48] sm:$0xff]
          %v801 = vld [vmem:[%s270 + $0x50] sm:$0xff]
          %v802 = vld [vmem:[%s270 + $0x58] sm:$0xff]
          %v803 = vld [vmem:[%s270 + $0x60] sm:$0xff]
          %v804 = vld [vmem:[%s270 + $0x68] sm:$0xff]
          %v805 = vld [vmem:[%s270 + $0x70] sm:$0xff]
          %v806 = vld [vmem:[%s270 + $0x78] sm:$0xff]
          %v807 = vld [vmem:[%s270 + $0x80] sm:$0xff]
          %v808 = vld [vmem:[%s270 + $0x88] sm:$0xff]
          %v809 = vld [vmem:[%s270 + $0x90] sm:$0xff]
          %v810 = vld [vmem:[%s270 + $0x98] sm:$0xff]
          %v811 = vld [vmem:[%s270 + $0xa0] sm:$0xff]
          %v812 = vld [vmem:[%s270 + $0xa8] sm:$0xff]
          %v813 = vld [vmem:[%s270 + $0xb0] sm:$0xff]
          %v814 = vld [vmem:[%s270 + $0xb8] sm:$0xff]
          %v815 = vld [vmem:[%s270 + $0xc0] sm:$0xff]
          %v816 = vld [vmem:[%s270 + $0xc8] sm:$0xff]
          %v817 = vld [vmem:[%s270 + $0xd0] sm:$0xff]
          %v818 = vld [vmem:[%s270 + $0xd8] sm:$0xff]
          %v819 = vld [vmem:[%s270 + $0xe0] sm:$0xff]
          %v820 = vld [vmem:[%s270 + $0xe8] sm:$0xff]
          %v821 = vld [vmem:[%s270 + $0xf0] sm:$0xff]
          %v822 = vld [vmem:[%s270 + $0xf8] sm:$0xff]
          %v823 = vadd.f32 %v791, %v636
          %v824 = vadd.f32 %v792, %v638
          %v825 = vadd.f32 %v793, %v641
          %v826 = vadd.f32 %v794, %v643
          %v827 = vadd.f32 %v795, %v646
          %v828 = vadd.f32 %v796, %v648
          %v829 = vadd.f32 %v797, %v651
          %v830 = vadd.f32 %v798, %v653
          %v831 = vadd.f32 %v799, %v656
          %v832 = vadd.f32 %v800, %v658
          %v833 = vadd.f32 %v801, %v661
          %v834 = vadd.f32 %v802, %v663
          %v835 = vadd.f32 %v803, %v666
          %v836 = vadd.f32 %v804, %v668
          %v837 = vadd.f32 %v805, %v671
          %v838 = vadd.f32 %v806, %v673
          %v839 = vadd.f32 %v807, %v676
          %v840 = vadd.f32 %v808, %v678
          %v841 = vadd.f32 %v809, %v681
          %v842 = vadd.f32 %v810, %v683
          %v843 = vadd.f32 %v811, %v686
          %v844 = vadd.f32 %v812, %v688
          %v845 = vadd.f32 %v813, %v691
          %v846 = vadd.f32 %v814, %v693
          %v847 = vadd.f32 %v815, %v696
          %v848 = vadd.f32 %v816, %v698
          %v849 = vadd.f32 %v817, %v701
          %v850 = vadd.f32 %v818, %v703
          %v851 = vadd.f32 %v819, %v706
          %v852 = vadd.f32 %v820, %v708
          %v853 = vadd.f32 %v821, %v711
          %v854 = vadd.f32 %v822, %v713
          %855 = vst [vmem:[%s270] sm:$0xff] %v823
          %856 = vst [vmem:[%s270 + $0x8] sm:$0xff] %v824
          %857 = vst [vmem:[%s270 + $0x10] sm:$0xff] %v825
          %858 = vst [vmem:[%s270 + $0x18] sm:$0xff] %v826
          %859 = vst [vmem:[%s270 + $0x20] sm:$0xff] %v827
          %860 = vst [vmem:[%s270 + $0x28] sm:$0xff] %v828
          %861 = vst [vmem:[%s270 + $0x30] sm:$0xff] %v829
          %862 = vst [vmem:[%s270 + $0x38] sm:$0xff] %v830
          %863 = vst [vmem:[%s270 + $0x40] sm:$0xff] %v831
          %864 = vst [vmem:[%s270 + $0x48] sm:$0xff] %v832
          %865 = vst [vmem:[%s270 + $0x50] sm:$0xff] %v833
          %866 = vst [vmem:[%s270 + $0x58] sm:$0xff] %v834
          %867 = vst [vmem:[%s270 + $0x60] sm:$0xff] %v835
          %868 = vst [vmem:[%s270 + $0x68] sm:$0xff] %v836
          %869 = vst [vmem:[%s270 + $0x70] sm:$0xff] %v837
          %870 = vst [vmem:[%s270 + $0x78] sm:$0xff] %v838
          %871 = vst [vmem:[%s270 + $0x80] sm:$0xff] %v839
          %872 = vst [vmem:[%s270 + $0x88] sm:$0xff] %v840
          %873 = vst [vmem:[%s270 + $0x90] sm:$0xff] %v841
          %874 = vst [vmem:[%s270 + $0x98] sm:$0xff] %v842
          %875 = vst [vmem:[%s270 + $0xa0] sm:$0xff] %v843
          %876 = vst [vmem:[%s270 + $0xa8] sm:$0xff] %v844
          %877 = vst [vmem:[%s270 + $0xb0] sm:$0xff] %v845
          %878 = vst [vmem:[%s270 + $0xb8] sm:$0xff] %v846
          %879 = vst [vmem:[%s270 + $0xc0] sm:$0xff] %v847
          %880 = vst [vmem:[%s270 + $0xc8] sm:$0xff] %v848
          %881 = vst [vmem:[%s270 + $0xd0] sm:$0xff] %v849
          %882 = vst [vmem:[%s270 + $0xd8] sm:$0xff] %v850
          %883 = vst [vmem:[%s270 + $0xe0] sm:$0xff] %v851
          %884 = vst [vmem:[%s270 + $0xe8] sm:$0xff] %v852
          %885 = vst [vmem:[%s270 + $0xf0] sm:$0xff] %v853
          %886 = vst [vmem:[%s270 + $0xf8] sm:$0xff] %v854
        $region48: #{tpu_custom_call.1} parent=39 // pred_fallthru
          _
        %s887 = sand.u32 %s164, 1
        %s888 = scalar_lea.sflag [#allocation3], %s887
        %s889 = sand.u32 %s164, 1
        %s890 = smul.addr %s889, 256
        %s891 = scalar_lea.vmem [#allocation2], %s890
        // Predicated region
        $region49: #{tpu_custom_call.1} parent=39 // pred_check
          %p892 = pneg %p174
        $region50: #{tpu_custom_call.1} parent=39 // pred_check_branch
          %894 = sbr.rel (%p892) target = $region52
        $region51: #{tpu_custom_call.1} parent=39 // pred_region
          %s895 = smul.u32 32, %s23
          %897 = vsyncadd %s888, 0
          %s898 = smul.addr %s895, 8
          %s899 = scalar_lea.hbm %s5, %s898
          %s900 = sshll.u32 %s891, 4
          %s901 = int_to_ptr.vmem [resolvable:$true] %s900
          %s902 = sshll.u32 %s899, 4
          %s903 = int_to_ptr.hbm [resolvable:$true] %s902
          %908 = dma.vmem_to_hbm [thread:$0]  %s901, 4096, %s903, %s888, 128, 128, 8
        $region52: #{tpu_custom_call.1} parent=39 // pred_fallthru
          _
      $region40: #{tpu_custom_call.1} parent=5 // pred_fallthru
        _
      %p909 = scmp.le.s32.totalorder 2, %s14
      // Predicated region
      $region53: #{tpu_custom_call.1} parent=5 // pred_check
        %p910 = pneg %p909
      $region54: #{tpu_custom_call.1} parent=5 // pred_check_branch
        %912 = sbr.rel (%p910) target = $region56
      $region55: #{tpu_custom_call.1} parent=5 // pred_region
        %s913 = ssub.s32 %s14, 2
        // Predicated region
        $region57: #{tpu_custom_call.1} parent=55 // pred_check
          %p914 = pneg %p180
        $region58: #{tpu_custom_call.1} parent=55 // pred_check_branch
          %916 = sbr.rel (%p914) target = $region60
        $region59: #{tpu_custom_call.1} parent=55 // pred_region
          %s917 = sand.u32 %s165, 1
          %s918 = scalar_lea.sflag [#allocation3], %s917
          %s919 = sand.u32 %s165, 1
          %s920 = smul.addr %s919, 256
          %s921 = scalar_lea.vmem [#allocation2], %s920
          %923 = dma.done %s918, 4096
        $region60: #{tpu_custom_call.1} parent=55 // pred_fallthru
          _
      $region56: #{tpu_custom_call.1} parent=5 // pred_fallthru
        _
    $region6: #{tpu_custom_call.1} parent=1 // loop_footer
      %s18 = sadd.s32 1, %s14
    $region7: #{tpu_custom_call.1} parent=1 // loop_footer_branch
      %13 = sbr.rel target = $region3
    $region8: #{tpu_custom_call.1} parent=1 // loop_exit
      _
    %924 = vsyncpa [#allocation3], 1
    %s925 = scalar_lea.sflag [#allocation3], 1
    %926 = vsyncpa %s925, 1

// kernel: tpu_custom_call.1
$region0: #{tpu_custom_call.1}
  #allocation0 [shape = 'u32[]', space=smem, size = 0x4, offset = 0x4, fixed_abs, tag = 'smem constant byte address 0x4 - core index']
  #allocation1 [shape = 'u32[72,128]{1,0:T(1,128)}', space=vmem, size = 0x9000, scoped, tag = 'internal scratch']
  %s0 = inlined_call_operand.vmem [shape: f32[512,64], index: 0, kind: input, shape index: {}]
  %s1 = inlined_call_operand.vmem [shape: bf16[64,128], index: 1, kind: input, shape index: {}]
  %s2 = inlined_call_operand.vmem [shape: f32[1,128], index: 2, kind: input, shape index: {}]
  %s3 = inlined_call_operand.vmem [shape: bf16[128,128], index: 3, kind: input, shape index: {}]
  %s4 = inlined_call_operand.vmem [shape: f32[1,128], index: 4, kind: input, shape index: {}]
  %s5 = inlined_call_operand.hbm [shape: f32[512,128], index: 5, kind: output, shape index: {}]
  %s6 = sld [smem:[#allocation0]]
  $region61: #{tpu_custom_call.1} parent=0
    _
  %s8 = ssub.s32 1, %s6
  %s9 = scalar_select 0, %s8, %s6
  $region1: #{tpu_custom_call.1} parent=0
    #allocation2 [shape = 'u8[262144]{0}', space=vmem, size = 0x40000, scoped, tag = 'output window, operand 0']
    #allocation3 [shape = 's32[2]{0}', space=sflag, size = 0x8, scoped, tag = 'scoped memory for tpu_custom_call.1']
    %10 = vsyncpa [#allocation3], 0
    %s11 = scalar_lea.sflag [#allocation3], 1
    %12 = vsyncpa %s11, 0
    loop: start=0, step=1, limit=4
    $region2: #{tpu_custom_call.1} parent=1 // loop_pre_header
      _
    $region3: #{tpu_custom_call.1} parent=1 // loop_header
      %s14 = sphi 0, %s18
      %p15 = scmp.ge.s32.totalorder %s14, 4
      %s21 = sphi 0, %s33
      %s22 = sphi 0, %s29
      %s23 = sphi 0, %s21
      %s24 = sphi 0, %s22
      %s25 = sphi 0, %s23
      %s26 = sphi 0, %s24
      %s36 = sphi 0, %s38
      %s39 = sphi 0, %s36
      %s40 = sphi 0, %s39
      %s56 = sphi 0, %s40
      %s62 = sphi 0, %s64
      %s65 = sphi 0, %s62
      %s66 = sphi 0, %s65
      %s82 = sphi 0, %s66
      %s88 = sphi 0, %s90
      %s91 = sphi 0, %s88
      %s92 = sphi 0, %s91
      %s108 = sphi 0, %s92
      %s114 = sphi 0, %s116
      %s117 = sphi 0, %s114
      %s118 = sphi 0, %s117
      %s134 = sphi 0, %s118
      %s138 = sphi 0, %s138
      %s140 = sphi 0, %s138
      %s141 = sphi 0, %s140
      %s155 = sphi 0, %s141
      %s161 = sphi 0, %s163
      %s164 = sphi 0, %s161
      %s165 = sphi 0, %s164
      %s181 = sphi 0, %s165
    $region4: #{tpu_custom_call.1} parent=1 // loop_header_branch
      %17 = sbr.rel (%p15) target = $region8
    $region5: #{tpu_custom_call.1} parent=1 // loop_body
      %s19 = ssub.s32 %s14, 1
      %s20 = ssub.s32 %s14, 2
      %s27 = sadd.s32 1, %s22
      %p28 = scmp.ge.s32.totalorder %s27, 1
      %s29 = scalar_select %p28, 0, %s27
      %s30 = sadd.s32 1, %s21
      %s31 = scalar_select %p28, %s30, %s21
      %p32 = scmp.ge.s32.totalorder %s31, 2
      %s33 = scalar_select %p32, 0, %s31
      %s34 = ssub.s32 %s21, %s33
      %p35 = scmp.eq.s32.totalorder %s34, 0
      %s37 = sadd.s32 %s36, 1
      %s38 = scalar_select %p35, %s36, %s37
      %p41 = pneg %p35
      %p42 = scmp.eq.s32.totalorder %s14, 1
      %p43 = por %p41, %p42
      %p44 = scmp.ne.s32.totalorder %s36, %s39
      %p45 = scmp.eq.s32.totalorder %s14, 0
      %p46 = por %p44, %p45
      %p47 = scmp.ne.s32.totalorder %s36, %s39
      %p48 = scmp.eq.s32.totalorder %s19, 1
      %p49 = por %p47, %p48
      %p50 = scmp.ne.s32.totalorder %s39, %s40
      %p51 = scmp.eq.s32.totalorder %s19, 0
      %p52 = por %p50, %p51
      %p53 = scmp.ne.s32.totalorder %s39, %s40
      %p54 = scmp.eq.s32.totalorder %s20, 1
      %p55 = por %p53, %p54
      %p57 = scmp.ne.s32.totalorder %s40, %s56
      %p58 = scmp.eq.s32.totalorder %s20, 0
      %p59 = por %p57, %p58
      %s60 = ssub.s32 %s22, %s29
      %p61 = scmp.eq.s32.totalorder %s60, 0
      %s63 = sadd.s32 %s62, 1
      %s64 = scalar_select %p61, %s62, %s63
      %p67 = pneg %p61
      %p68 = scmp.eq.s32.totalorder %s14, 1
      %p69 = por %p67, %p68
      %p70 = scmp.ne.s32.totalorder %s62, %s65
      %p71 = scmp.eq.s32.totalorder %s14, 0
      %p72 = por %p70, %p71
      %p73 = scmp.ne.s32.totalorder %s62, %s65
      %p74 = scmp.eq.s32.totalorder %s19, 1
      %p75 = por %p73, %p74
      %p76 = scmp.ne.s32.totalorder %s65, %s66
      %p77 = scmp.eq.s32.totalorder %s19, 0
      %p78 = por %p76, %p77
      %p79 = scmp.ne.s32.totalorder %s65, %s66
      %p80 = scmp.eq.s32.totalorder %s20, 1
      %p81 = por %p79, %p80
      %p83 = scmp.ne.s32.totalorder %s66, %s82
      %p84 = scmp.eq.s32.totalorder %s20, 0
      %p85 = por %p83, %p84
      %s86 = ssub.s32 %s22, %s29
      %p87 = scmp.eq.s32.totalorder %s86, 0
      %s89 = sadd.s32 %s88, 1
      %s90 = scalar_select %p87, %s88, %s89
      %p93 = pneg %p87
      %p94 = scmp.eq.s32.totalorder %s14, 1
      %p95 = por %p93, %p94
      %p96 = scmp.ne.s32.totalorder %s88, %s91
      %p97 = scmp.eq.s32.totalorder %s14, 0
      %p98 = por %p96, %p97
      %p99 = scmp.ne.s32.totalorder %s88, %s91
      %p100 = scmp.eq.s32.totalorder %s19, 1
      %p101 = por %p99, %p100
      %p102 = scmp.ne.s32.totalorder %s91, %s92
      %p103 = scmp.eq.s32.totalorder %s19, 0
      %p104 = por %p102, %p103
      %p105 = scmp.ne.s32.totalorder %s91, %s92
      %p106 = scmp.eq.s32.totalorder %s20, 1
      %p107 = por %p105, %p106
      %p109 = scmp.ne.s32.totalorder %s92, %s108
      %p110 = scmp.eq.s32.totalorder %s20, 0
      %p111 = por %p109, %p110
      %s112 = ssub.s32 %s22, %s29
      %p113 = scmp.eq.s32.totalorder %s112, 0
      %s115 = sadd.s32 %s114, 1
      %s116 = scalar_select %p113, %s114, %s115
      %p119 = pneg %p113
      %p120 = scmp.eq.s32.totalorder %s14, 1
      %p121 = por %p119, %p120
      %p122 = scmp.ne.s32.totalorder %s114, %s117
      %p123 = scmp.eq.s32.totalorder %s14, 0
      %p124 = por %p122, %p123
      %p125 = scmp.ne.s32.totalorder %s114, %s117
      %p126 = scmp.eq.s32.totalorder %s19, 1
      %p127 = por %p125, %p126
      %p128 = scmp.ne.s32.totalorder %s117, %s118
      %p129 = scmp.eq.s32.totalorder %s19, 0
      %p130 = por %p128, %p129
      %p131 = scmp.ne.s32.totalorder %s117, %s118
      %p132 = scmp.eq.s32.totalorder %s20, 1
      %p133 = por %p131, %p132
      %p135 = scmp.ne.s32.totalorder %s118, %s134
      %p136 = scmp.eq.s32.totalorder %s20, 0
      %p137 = por %p135, %p136
      %s139 = sadd.s32 %s138, 1
      %p142 = scmp.eq.s32.totalorder %s14, 1
      %p143 = scmp.ne.s32.totalorder %s138, %s140
      %p144 = scmp.eq.s32.totalorder %s14, 0
      %p145 = por %p143, %p144
      %p146 = scmp.ne.s32.totalorder %s138, %s140
      %p147 = scmp.eq.s32.totalorder %s19, 1
      %p148 = por %p146, %p147
      %p149 = scmp.ne.s32.totalorder %s140, %s141
      %p150 = scmp.eq.s32.totalorder %s19, 0
      %p151 = por %p149, %p150
      %p152 = scmp.ne.s32.totalorder %s140, %s141
      %p153 = scmp.eq.s32.totalorder %s20, 1
      %p154 = por %p152, %p153
      %p156 = scmp.ne.s32.totalorder %s141, %s155
      %p157 = scmp.eq.s32.totalorder %s20, 0
      %p158 = por %p156, %p157
      %s159 = ssub.s32 %s21, %s33
      %p160 = scmp.eq.s32.totalorder %s159, 0
      %s162 = sadd.s32 %s161, 1
      %s163 = scalar_select %p160, %s161, %s162
      %p166 = pneg %p160
      %p167 = scmp.eq.s32.totalorder %s14, 1
      %p168 = por %p166, %p167
      %p169 = scmp.ne.s32.totalorder %s161, %s164
      %p170 = scmp.eq.s32.totalorder %s14, 0
      %p171 = por %p169, %p170
      %p172 = scmp.ne.s32.totalorder %s161, %s164
      %p173 = scmp.eq.s32.totalorder %s19, 1
      %p174 = por %p172, %p173
      %p175 = scmp.ne.s32.totalorder %s164, %s165
      %p176 = scmp.eq.s32.totalorder %s19, 0
      %p177 = por %p175, %p176
      %p178 = scmp.ne.s32.totalorder %s164, %s165
      %p179 = scmp.eq.s32.totalorder %s20, 1
      %p180 = por %p178, %p179
      %p182 = scmp.ne.s32.totalorder %s165, %s181
      %p183 = scmp.eq.s32.totalorder %s20, 0
      %p184 = por %p182, %p183
      %p185 = scmp.le.s32.totalorder 1, %s14
      %p186 = scmp.lt.s32.totalorder %s14, 3
      %p187 = pnand %p185, %p186
      %p188 = pneg %p187
      // Predicated region
      $region9: #{tpu_custom_call.1} parent=5 // pred_check
        _
      $region10: #{tpu_custom_call.1} parent=5 // pred_check_branch
        %190 = sbr.rel (%p187) target = $region12
      $region11: #{tpu_custom_call.1} parent=5 // pred_region
        %s191 = ssub.s32 %s14, 1
        // Predicated region
        $region13: #{tpu_custom_call.1} parent=11 // pred_check
          %p192 = pneg %p78
        $region14: #{tpu_custom_call.1} parent=11 // pred_check_branch
          %194 = sbr.rel (%p192) target = $region16
        $region15: #{tpu_custom_call.1} parent=11 // pred_region
          %p195 = scmp.lt.s32.totalorder %s24, 0
          %s196 = scalar_select %p195, %s24, 0
          %s197 = smul.addr %s196, 4
          %s198 = scalar_lea.vmem %s1, %s197
        $region16: #{tpu_custom_call.1} parent=11 // pred_fallthru
          _
        // Predicated region
        $region17: #{tpu_custom_call.1} parent=11 // pred_check
          %p199 = pneg %p104
        $region18: #{tpu_custom_call.1} parent=11 // pred_check_branch
          %201 = sbr.rel (%p199) target = $region20
        $region19: #{tpu_custom_call.1} parent=11 // pred_region
          %p202 = scmp.lt.s32.totalorder %s24, 0
          %s203 = scalar_select %p202, %s24, 0
          %s204 = scalar_lea.vmem %s2, %s203
        $region20: #{tpu_custom_call.1} parent=11 // pred_fallthru
          _
        // Predicated region
        $region21: #{tpu_custom_call.1} parent=11 // pred_check
          %p205 = pneg %p130
        $region22: #{tpu_custom_call.1} parent=11 // pred_check_branch
          %207 = sbr.rel (%p205) target = $region24
        $region23: #{tpu_custom_call.1} parent=11 // pred_region
          %s208 = smul.u32 16, %s24
          %p209 = scmp.lt.s32.totalorder %s208, 15
          %s210 = scalar_select %p209, %s208, 15
          %s211 = smul.addr %s210, 4
          %s212 = scalar_lea.vmem %s3, %s211
          %s213 = smul.u32 16, %s24
        $region24: #{tpu_custom_call.1} parent=11 // pred_fallthru
          _
        // Predicated region
        $region25: #{tpu_custom_call.1} parent=11 // pred_check
          %p214 = pneg %p151
        $region26: #{tpu_custom_call.1} parent=11 // pred_check_branch
          %216 = sbr.rel (%p214) target = $region28
        $region27: #{tpu_custom_call.1} parent=11 // pred_region
          _
        $region28: #{tpu_custom_call.1} parent=11 // pred_fallthru
          _
      $region12: #{tpu_custom_call.1} parent=5 // pred_fallthru
        _
      %p217 = scmp.lt.s32.totalorder %s14, 2
      // Predicated region
      $region29: #{tpu_custom_call.1} parent=5 // pred_check
        %p218 = pneg %p217
      $region30: #{tpu_custom_call.1} parent=5 // pred_check_branch
        %220 = sbr.rel (%p218) target = $region32
      $region31: #{tpu_custom_call.1} parent=5 // pred_region
        // Predicated region
        $region33: #{tpu_custom_call.1} parent=31 // pred_check
          %p221 = pneg %p46
        $region34: #{tpu_custom_call.1} parent=31 // pred_check_branch
          %223 = sbr.rel (%p221) target = $region36
        $region35: #{tpu_custom_call.1} parent=31 // pred_region
          %s224 = smul.u32 32, %s21
          %p225 = scmp.lt.s32.totalorder %s224, 63
          %s226 = scalar_select %p225, %s224, 63
          %s227 = smul.addr %s226, 8
          %s228 = scalar_lea.vmem %s0, %s227
          %s229 = smul.u32 32, %s21
        $region36: #{tpu_custom_call.1} parent=31 // pred_fallthru
          _
      $region32: #{tpu_custom_call.1} parent=5 // pred_fallthru
        _
      %p230 = scmp.le.s32.totalorder 1, %s14
      %p231 = scmp.lt.s32.totalorder %s14, 3
      %p232 = pnand %p230, %p231
      %p233 = pneg %p232
      // Predicated region
      $region37: #{tpu_custom_call.1} parent=5 // pred_check
        _
      $region38: #{tpu_custom_call.1} parent=5 // pred_check_branch
        %235 = sbr.rel (%p232) target = $region40
      $region39: #{tpu_custom_call.1} parent=5 // pred_region
        %s236 = ssub.s32 %s14, 1
        %s237 = smul.u32 32, %s23
        %p238 = scmp.lt.s32.totalorder %s237, 63
        %s239 = scalar_select %p238, %s237, 63
        %s240 = smul.addr %s239, 8
        %s241 = scalar_lea.vmem %s0, %s240
        %p242 = pneg %p52
        %p243 = pneg %p49
        %p244 = scmp.lt.s32.totalorder %s24, 0
        %s245 = scalar_select %p244, %s24, 0
        %s246 = smul.addr %s245, 4
        %s247 = scalar_lea.vmem %s1, %s246
        %p248 = pneg %p78
        %p249 = pneg %p75
        %p250 = scmp.lt.s32.totalorder %s24, 0
        %s251 = scalar_select %p250, %s24, 0
        %s252 = scalar_lea.vmem %s2, %s251
        %p253 = pneg %p104
        %p254 = pneg %p101
        %s255 = smul.u32 16, %s24
        %p256 = scmp.lt.s32.totalorder %s255, 15
        %s257 = scalar_select %p256, %s255, 15
        %s258 = smul.addr %s257, 4
        %s259 = scalar_lea.vmem %s3, %s258
        %p260 = pneg %p130
        %p261 = pneg %p127
        %p262 = pneg %p151
        %p263 = pneg %p148
        %p264 = pneg %p177
        %p265 = pneg %p174
        %s266 = sand.u32 %s164, 1
        %s267 = scalar_lea.sflag [#allocation3], %s266
        %s268 = sand.u32 %s164, 1
        %s269 = smul.addr %s268, 256
        %s270 = scalar_lea.vmem [#allocation2], %s269
        %s271 = smul.u32 32, %s23
        %p272 = scmp.lt.s32.totalorder %s271, 63
        %s273 = scalar_select %p272, %s271, 63
        %s274 = smul.addr %s273, 8
        %s275 = scalar_lea.vmem %s0, %s274
        %s276 = smul.u32 32, %s23
        %p277 = scmp.lt.s32.totalorder %s24, 0
        %s278 = scalar_select %p277, %s24, 0
        %s279 = smul.addr %s278, 4
        %s280 = scalar_lea.vmem %s1, %s279
        %p281 = scmp.lt.s32.totalorder %s24, 0
        %s282 = scalar_select %p281, %s24, 0
        %s283 = scalar_lea.vmem %s2, %s282
        %s284 = smul.u32 16, %s24
        %p285 = scmp.lt.s32.totalorder %s284, 15
        %s286 = scalar_select %p285, %s284, 15
        %s287 = smul.addr %s286, 4
        %s288 = scalar_lea.vmem %s3, %s287
        %s289 = smul.u32 16, %s24
        %s290 = smul.u32 32, %s23
        %v292 = vld [vmem:[%s275] sm:$0xff]
        %v293 = vld [vmem:[%s275 + $0x8] sm:$0xff]
        %v294 = vld [vmem:[%s275 + $0x10] sm:$0xff]
        %v295 = vld [vmem:[%s275 + $0x18] sm:$0xff]
        %v296 = vld [vmem:[%s275 + $0x20] sm:$0xff]
        %v297 = vld [vmem:[%s275 + $0x28] sm:$0xff]
        %v298 = vld [vmem:[%s275 + $0x30] sm:$0xff]
        %v299 = vld [vmem:[%s275 + $0x38] sm:$0xff]
        %v300 = vld [vmem:[%s275 + $0x40] sm:$0xff]
        %v301 = vld [vmem:[%s275 + $0x48] sm:$0xff]
        %v302 = vld [vmem:[%s275 + $0x50] sm:$0xff]
        %v303 = vld [vmem:[%s275 + $0x58] sm:$0xff]
        %v304 = vld [vmem:[%s275 + $0x60] sm:$0xff]
        %v305 = vld [vmem:[%s275 + $0x68] sm:$0xff]
        %v306 = vld [vmem:[%s275 + $0x70] sm:$0xff]
        %v307 = vld [vmem:[%s275 + $0x78] sm:$0xff]
        %v308 = vld [vmem:[%s275 + $0x80] sm:$0xff]
        %v309 = vld [vmem:[%s275 + $0x88] sm:$0xff]
        %v310 = vld [vmem:[%s275 + $0x90] sm:$0xff]
        %v311 = vld [vmem:[%s275 + $0x98] sm:$0xff]
        %v312 = vld [vmem:[%s275 + $0xa0] sm:$0xff]
        %v313 = vld [vmem:[%s275 + $0xa8] sm:$0xff]
        %v314 = vld [vmem:[%s275 + $0xb0] sm:$0xff]
        %v315 = vld [vmem:[%s275 + $0xb8] sm:$0xff]
        %v316 = vld [vmem:[%s275 + $0xc0] sm:$0xff]
        %v317 = vld [vmem:[%s275 + $0xc8] sm:$0xff]
        %v318 = vld [vmem:[%s275 + $0xd0] sm:$0xff]
        %v319 = vld [vmem:[%s275 + $0xd8] sm:$0xff]
        %v320 = vld [vmem:[%s275 + $0xe0] sm:$0xff]
        %v321 = vld [vmem:[%s275 + $0xe8] sm:$0xff]
        %v322 = vld [vmem:[%s275 + $0xf0] sm:$0xff]
        %v323 = vld [vmem:[%s275 + $0xf8] sm:$0xff]
        %v324 = vpack.c.bf16 %v293, %v292
        %v325 = vpack.c.bf16 %v295, %v294
        %v326 = vpack.c.bf16 %v297, %v296
        %v327 = vpack.c.bf16 %v299, %v298
        %v328 = vpack.c.bf16 %v301, %v300
        %v329 = vpack.c.bf16 %v303, %v302
        %v330 = vpack.c.bf16 %v305, %v304
        %v331 = vpack.c.bf16 %v307, %v306
        %v332 = vpack.c.bf16 %v309, %v308
        %v333 = vpack.c.bf16 %v311, %v310
        %v334 = vpack.c.bf16 %v313, %v312
        %v335 = vpack.c.bf16 %v315, %v314
        %v336 = vpack.c.bf16 %v317, %v316
        %v337 = vpack.c.bf16 %v319, %v318
        %v338 = vpack.c.bf16 %v321, %v320
        %v339 = vpack.c.bf16 %v323, %v322
        %v340 = vld [vmem:[%s280] sm:$0xf]
        %v341 = vld [vmem:[%s280 + $0x4] sm:$0xf]
        %v342 = vld [vmem:[%s280 + $0x8] sm:$0xf]
        %v343 = vld [vmem:[%s280 + $0xc] sm:$0xf]
        %v344 = vld [vmem:[%s280 + $0x10] sm:$0xf]
        %v345 = vld [vmem:[%s280 + $0x14] sm:$0xf]
        %v346 = vld [vmem:[%s280 + $0x18] sm:$0xf]
        %v347 = vld [vmem:[%s280 + $0x1c] sm:$0xf]
        %v348 = vld [vmem:[%s283] sm:$0x1]
        %v350 = vperm.slane %v348, 0
        %v360 = vunpack.c.l.b16 %v340
        %v361 = vunpack.c.l.b16 %v341
        %v362 = vunpack.c.l.b16 %v342
        %v363 = vunpack.c.l.b16 %v343
        %v364 = vunpack.c.l.b16 %v344
        %v365 = vunpack.c.l.b16 %v345
        %v366 = vunpack.c.l.b16 %v346
        %v367 = vunpack.c.l.b16 %v347
        %v368 = vpack.c.b16 %v361, %v360
        %v369 = vpack.c.b16 %v363, %v362
        %v370 = vpack.c.b16 %v365, %v364
        %v371 = vpack.c.b16 %v367, %v366
        %vm376 = vcmask 523264
        %v378 = vsel %vm376, %v324, 0
        %v381 = vsel %vm376, %v325, 0
        %v384 = vsel %vm376, %v326, 0
        %v387 = vsel %vm376, %v327, 0
        %v390 = vsel %vm376, %v328, 0
        %v393 = vsel %vm376, %v329, 0
        %v396 = vsel %vm376, %v330, 0
        %v399 = vsel %vm376, %v331, 0
        %v402 = vsel %vm376, %v332, 0
        %v405 = vsel %vm376, %v333, 0
        %v408 = vsel %vm376, %v334, 0
        %v411 = vsel %vm376, %v335, 0
        %v414 = vsel %vm376, %v336, 0
        %v417 = vsel %vm376, %v337, 0
        %v420 = vsel %vm376, %v338, 0
        %v423 = vsel %vm376, %v339, 0
        %425 = vmatpush.bf16.msra.mxu0 0
        %426 = vmatpush.bf16.msra.mxu0 0
        %427 = vmatpush.bf16.msra.mxu0 0
        %428 = vmatpush.bf16.msra.mxu0 0
        %429 = vmatpush.bf16.msra.mxu0 %v371
        %430 = vmatpush.bf16.msra.mxu0 %v370
        %431 = vmatpush.bf16.msra.mxu0 %v369
        %432 = vmatpush.bf16.msra.mxu0 %v368
        %433 = vmatmul.bf16.gmra.mxu0 %v378
        %v434 = vpop.f32.mrf.mxu0
        %v435 = vadd.f32 %v350, %v434
        %v436 = vpop.f32.mrf.mxu0
        %v437 = vadd.f32 %v350, %v436
        %438 = vmatmul.bf16.gmra.mxu0 %v381
        %v439 = vpop.f32.mrf.mxu0
        %v440 = vadd.f32 %v350, %v439
        %v441 = vpop.f32.mrf.mxu0
        %v442 = vadd.f32 %v350, %v441
        %443 = vmatmul.bf16.gmra.mxu0 %v384
        %v444 = vpop.f32.mrf.mxu0
        %v445 = vadd.f32 %v350, %v444
        %v446 = vpop.f32.mrf.mxu0
        %v447 = vadd.f32 %v350, %v446
        %448 = vmatmul.bf16.gmra.mxu0 %v387
        %v449 = vpop.f32.mrf.mxu0
        %v450 = vadd.f32 %v350, %v449
        %v451 = vpop.f32.mrf.mxu0
        %v452 = vadd.f32 %v350, %v451
        %453 = vmatmul.bf16.gmra.mxu0 %v390
        %v454 = vpop.f32.mrf.mxu0
        %v455 = vadd.f32 %v350, %v454
        %v456 = vpop.f32.mrf.mxu0
        %v457 = vadd.f32 %v350, %v456
        %458 = vmatmul.bf16.gmra.mxu0 %v393
        %v459 = vpop.f32.mrf.mxu0
        %v460 = vadd.f32 %v350, %v459
        %v461 = vpop.f32.mrf.mxu0
        %v462 = vadd.f32 %v350, %v461
        %463 = vmatmul.bf16.gmra.mxu0 %v396
        %v464 = vpop.f32.mrf.mxu0
        %v465 = vadd.f32 %v350, %v464
        %v466 = vpop.f32.mrf.mxu0
        %v467 = vadd.f32 %v350, %v466
        %468 = vmatmul.bf16.gmra.mxu0 %v399
        %v469 = vpop.f32.mrf.mxu0
        %v470 = vadd.f32 %v350, %v469
        %v471 = vpop.f32.mrf.mxu0
        %v472 = vadd.f32 %v350, %v471
        %473 = vmatmul.bf16.gmra.mxu0 %v402
        %v474 = vpop.f32.mrf.mxu0
        %v475 = vadd.f32 %v350, %v474
        %v476 = vpop.f32.mrf.mxu0
        %v477 = vadd.f32 %v350, %v476
        %478 = vmatmul.bf16.gmra.mxu0 %v405
        %v479 = vpop.f32.mrf.mxu0
        %v480 = vadd.f32 %v350, %v479
        %v481 = vpop.f32.mrf.mxu0
        %v482 = vadd.f32 %v350, %v481
        %483 = vmatmul.bf16.gmra.mxu0 %v408
        %v484 = vpop.f32.mrf.mxu0
        %v485 = vadd.f32 %v350, %v484
        %v486 = vpop.f32.mrf.mxu0
        %v487 = vadd.f32 %v350, %v486
        %488 = vmatmul.bf16.gmra.mxu0 %v411
        %v489 = vpop.f32.mrf.mxu0
        %v490 = vadd.f32 %v350, %v489
        %v491 = vpop.f32.mrf.mxu0
        %v492 = vadd.f32 %v350, %v491
        %493 = vmatmul.bf16.gmra.mxu0 %v414
        %v494 = vpop.f32.mrf.mxu0
        %v495 = vadd.f32 %v350, %v494
        %v496 = vpop.f32.mrf.mxu0
        %v497 = vadd.f32 %v350, %v496
        %498 = vmatmul.bf16.gmra.mxu0 %v417
        %v499 = vpop.f32.mrf.mxu0
        %v500 = vadd.f32 %v350, %v499
        %v501 = vpop.f32.mrf.mxu0
        %v502 = vadd.f32 %v350, %v501
        %503 = vmatmul.bf16.gmra.mxu0 %v420
        %v504 = vpop.f32.mrf.mxu0
        %v505 = vadd.f32 %v350, %v504
        %v506 = vpop.f32.mrf.mxu0
        %v507 = vadd.f32 %v350, %v506
        %508 = vmatmul.bf16.gmra.mxu0 %v423
        %v509 = vpop.f32.mrf.mxu0
        %v510 = vadd.f32 %v350, %v509
        %v511 = vpop.f32.mrf.mxu0
        %v512 = vadd.f32 %v350, %v511
        %513 = vdwg.mxu0
        %v514 = vmax.f32 %v435, 0.0
        %v515 = vmax.f32 %v437, 0.0
        %v516 = vmax.f32 %v440, 0.0
        %v517 = vmax.f32 %v442, 0.0
        %v518 = vmax.f32 %v445, 0.0
        %v519 = vmax.f32 %v447, 0.0
        %v520 = vmax.f32 %v450, 0.0
        %v521 = vmax.f32 %v452, 0.0
        %v522 = vmax.f32 %v455, 0.0
        %v523 = vmax.f32 %v457, 0.0
        %v524 = vmax.f32 %v460, 0.0
        %v525 = vmax.f32 %v462, 0.0
        %v526 = vmax.f32 %v465, 0.0
        %v527 = vmax.f32 %v467, 0.0
        %v528 = vmax.f32 %v470, 0.0
        %v529 = vmax.f32 %v472, 0.0
        %v530 = vmax.f32 %v475, 0.0
        %v531 = vmax.f32 %v477, 0.0
        %v532 = vmax.f32 %v480, 0.0
        %v533 = vmax.f32 %v482, 0.0
        %v534 = vmax.f32 %v485, 0.0
        %v535 = vmax.f32 %v487, 0.0
        %v536 = vmax.f32 %v490, 0.0
        %v537 = vmax.f32 %v492, 0.0
        %v538 = vmax.f32 %v495, 0.0
        %v539 = vmax.f32 %v497, 0.0
        %v540 = vmax.f32 %v500, 0.0
        %v541 = vmax.f32 %v502, 0.0
        %v542 = vmax.f32 %v505, 0.0
        %v543 = vmax.f32 %v507, 0.0
        %v544 = vmax.f32 %v510, 0.0
        %v545 = vmax.f32 %v512, 0.0
        %v546 = vpack.c.bf16 %v515, %v514
        %v547 = vpack.c.bf16 %v517, %v516
        %v548 = vpack.c.bf16 %v519, %v518
        %v549 = vpack.c.bf16 %v521, %v520
        %v550 = vpack.c.bf16 %v523, %v522
        %v551 = vpack.c.bf16 %v525, %v524
        %v552 = vpack.c.bf16 %v527, %v526
        %v553 = vpack.c.bf16 %v529, %v528
        %v554 = vpack.c.bf16 %v531, %v530
        %v555 = vpack.c.bf16 %v533, %v532
        %v556 = vpack.c.bf16 %v535, %v534
        %v557 = vpack.c.bf16 %v537, %v536
        %v558 = vpack.c.bf16 %v539, %v538
        %v559 = vpack.c.bf16 %v541, %v540
        %v560 = vpack.c.bf16 %v543, %v542
        %v561 = vpack.c.bf16 %v545, %v544
        %v562 = vld [vmem:[%s288] sm:$0xf]
        %v563 = vld [vmem:[%s288 + $0x4] sm:$0xf]
        %v564 = vld [vmem:[%s288 + $0x8] sm:$0xf]
        %v565 = vld [vmem:[%s288 + $0xc] sm:$0xf]
        %v566 = vld [vmem:[%s288 + $0x10] sm:$0xf]
        %v567 = vld [vmem:[%s288 + $0x14] sm:$0xf]
        %v568 = vld [vmem:[%s288 + $0x18] sm:$0xf]
        %v569 = vld [vmem:[%s288 + $0x1c] sm:$0xf]
        %v570 = vld [vmem:[%s288 + $0x20] sm:$0xf]
        %v571 = vld [vmem:[%s288 + $0x24] sm:$0xf]
        %v572 = vld [vmem:[%s288 + $0x28] sm:$0xf]
        %v573 = vld [vmem:[%s288 + $0x2c] sm:$0xf]
        %v574 = vld [vmem:[%s288 + $0x30] sm:$0xf]
        %v575 = vld [vmem:[%s288 + $0x34] sm:$0xf]
        %v576 = vld [vmem:[%s288 + $0x38] sm:$0xf]
        %v577 = vld [vmem:[%s288 + $0x3c] sm:$0xf]
        %v594 = vunpack.c.l.b16 %v562
        %v595 = vunpack.c.l.b16 %v563
        %v596 = vunpack.c.l.b16 %v564
        %v597 = vunpack.c.l.b16 %v565
        %v598 = vunpack.c.l.b16 %v566
        %v599 = vunpack.c.l.b16 %v567
        %v600 = vunpack.c.l.b16 %v568
        %v601 = vunpack.c.l.b16 %v569
        %v602 = vunpack.c.l.b16 %v570
        %v603 = vunpack.c.l.b16 %v571
        %v604 = vunpack.c.l.b16 %v572
        %v605 = vunpack.c.l.b16 %v573
        %v606 = vunpack.c.l.b16 %v574
        %v607 = vunpack.c.l.b16 %v575
        %v608 = vunpack.c.l.b16 %v576
        %v609 = vunpack.c.l.b16 %v577
        %v610 = vpack.c.b16 %v595, %v594
        %v611 = vpack.c.b16 %v597, %v596
        %v612 = vpack.c.b16 %v599, %v598
        %v613 = vpack.c.b16 %v601, %v600
        %v614 = vpack.c.b16 %v603, %v602
        %v615 = vpack.c.b16 %v605, %v604
        %v616 = vpack.c.b16 %v607, %v606
        %v617 = vpack.c.b16 %v609, %v608
        %626 = vmatpush.bf16.msra.mxu0 %v617
        %627 = vmatpush.bf16.msra.mxu0 %v616
        %628 = vmatpush.bf16.msra.mxu0 %v615
        %629 = vmatpush.bf16.msra.mxu0 %v614
        %630 = vmatpush.bf16.msra.mxu0 %v613
        %631 = vmatpush.bf16.msra.mxu0 %v612
        %632 = vmatpush.bf16.msra.mxu0 %v611
        %633 = vmatpush.bf16.msra.mxu0 %v610
        %634 = vmatmul.bf16.gmra.mxu0 %v546
        %v635 = vpop.f32.mrf.mxu0
        %v636 = vadd.f32 0.0, %v635
        %v637 = vpop.f32.mrf.mxu0
        %v638 = vadd.f32 0.0, %v637
        %639 = vmatmul.bf16.gmra.mxu0 %v547
        %v640 = vpop.f32.mrf.mxu0
        %v641 = vadd.f32 0.0, %v640
        %v642 = vpop.f32.mrf.mxu0
        %v643 = vadd.f32 0.0, %v642
        %644 = vmatmul.bf16.gmra.mxu0 %v548
        %v645 = vpop.f32.mrf.mxu0
        %v646 = vadd.f32 0.0, %v645
        %v647 = vpop.f32.mrf.mxu0
        %v648 = vadd.f32 0.0, %v647
        %649 = vmatmul.bf16.gmra.mxu0 %v549
        %v650 = vpop.f32.mrf.mxu0
        %v651 = vadd.f32 0.0, %v650
        %v652 = vpop.f32.mrf.mxu0
        %v653 = vadd.f32 0.0, %v652
        %654 = vmatmul.bf16.gmra.mxu0 %v550
        %v655 = vpop.f32.mrf.mxu0
        %v656 = vadd.f32 0.0, %v655
        %v657 = vpop.f32.mrf.mxu0
        %v658 = vadd.f32 0.0, %v657
        %659 = vmatmul.bf16.gmra.mxu0 %v551
        %v660 = vpop.f32.mrf.mxu0
        %v661 = vadd.f32 0.0, %v660
        %v662 = vpop.f32.mrf.mxu0
        %v663 = vadd.f32 0.0, %v662
        %664 = vmatmul.bf16.gmra.mxu0 %v552
        %v665 = vpop.f32.mrf.mxu0
        %v666 = vadd.f32 0.0, %v665
        %v667 = vpop.f32.mrf.mxu0
        %v668 = vadd.f32 0.0, %v667
        %669 = vmatmul.bf16.gmra.mxu0 %v553
        %v670 = vpop.f32.mrf.mxu0
        %v671 = vadd.f32 0.0, %v670
        %v672 = vpop.f32.mrf.mxu0
        %v673 = vadd.f32 0.0, %v672
        %674 = vmatmul.bf16.gmra.mxu0 %v554
        %v675 = vpop.f32.mrf.mxu0
        %v676 = vadd.f32 0.0, %v675
        %v677 = vpop.f32.mrf.mxu0
        %v678 = vadd.f32 0.0, %v677
        %679 = vmatmul.bf16.gmra.mxu0 %v555
        %v680 = vpop.f32.mrf.mxu0
        %v681 = vadd.f32 0.0, %v680
        %v682 = vpop.f32.mrf.mxu0
        %v683 = vadd.f32 0.0, %v682
        %684 = vmatmul.bf16.gmra.mxu0 %v556
        %v685 = vpop.f32.mrf.mxu0
        %v686 = vadd.f32 0.0, %v685
        %v687 = vpop.f32.mrf.mxu0
        %v688 = vadd.f32 0.0, %v687
        %689 = vmatmul.bf16.gmra.mxu0 %v557
        %v690 = vpop.f32.mrf.mxu0
        %v691 = vadd.f32 0.0, %v690
        %v692 = vpop.f32.mrf.mxu0
        %v693 = vadd.f32 0.0, %v692
        %694 = vmatmul.bf16.gmra.mxu0 %v558
        %v695 = vpop.f32.mrf.mxu0
        %v696 = vadd.f32 0.0, %v695
        %v697 = vpop.f32.mrf.mxu0
        %v698 = vadd.f32 0.0, %v697
        %699 = vmatmul.bf16.gmra.mxu0 %v559
        %v700 = vpop.f32.mrf.mxu0
        %v701 = vadd.f32 0.0, %v700
        %v702 = vpop.f32.mrf.mxu0
        %v703 = vadd.f32 0.0, %v702
        %704 = vmatmul.bf16.gmra.mxu0 %v560
        %v705 = vpop.f32.mrf.mxu0
        %v706 = vadd.f32 0.0, %v705
        %v707 = vpop.f32.mrf.mxu0
        %v708 = vadd.f32 0.0, %v707
        %709 = vmatmul.bf16.gmra.mxu0 %v561
        %v710 = vpop.f32.mrf.mxu0
        %v711 = vadd.f32 0.0, %v710
        %v712 = vpop.f32.mrf.mxu0
        %v713 = vadd.f32 0.0, %v712
        %714 = vdwg.mxu0
        %p715 = scmp.eq.s32.totalorder %s24, 0
        // Predicated region
        $region41: #{tpu_custom_call.1} parent=39 // pred_check
          %p716 = pneg %p715
        $region42: #{tpu_custom_call.1} parent=39 // pred_check_branch
          %718 = sbr.rel (%p716) target = $region44
        $region43: #{tpu_custom_call.1} parent=39 // pred_region
          %v719 = vld [vmem:[%s4] sm:$0x1]
          %v721 = vperm.slane %v719, 0
          %v723 = vadd.f32 %v636, %v721
          %v724 = vadd.f32 %v638, %v721
          %v725 = vadd.f32 %v641, %v721
          %v726 = vadd.f32 %v643, %v721
          %v727 = vadd.f32 %v646, %v721
          %v728 = vadd.f32 %v648, %v721
          %v729 = vadd.f32 %v651, %v721
          %v730 = vadd.f32 %v653, %v721
          %v731 = vadd.f32 %v656, %v721
          %v732 = vadd.f32 %v658, %v721
          %v733 = vadd.f32 %v661, %v721
          %v734 = vadd.f32 %v663, %v721
          %v735 = vadd.f32 %v666, %v721
          %v736 = vadd.f32 %v668, %v721
          %v737 = vadd.f32 %v671, %v721
          %v738 = vadd.f32 %v673, %v721
          %v739 = vadd.f32 %v676, %v721
          %v740 = vadd.f32 %v678, %v721
          %v741 = vadd.f32 %v681, %v721
          %v742 = vadd.f32 %v683, %v721
          %v743 = vadd.f32 %v686, %v721
          %v744 = vadd.f32 %v688, %v721
          %v745 = vadd.f32 %v691, %v721
          %v746 = vadd.f32 %v693, %v721
          %v747 = vadd.f32 %v696, %v721
          %v748 = vadd.f32 %v698, %v721
          %v749 = vadd.f32 %v701, %v721
          %v750 = vadd.f32 %v703, %v721
          %v751 = vadd.f32 %v706, %v721
          %v752 = vadd.f32 %v708, %v721
          %v753 = vadd.f32 %v711, %v721
          %v754 = vadd.f32 %v713, %v721
          %755 = vst [vmem:[%s270] sm:$0xff] %v723
          %756 = vst [vmem:[%s270 + $0x8] sm:$0xff] %v724
          %757 = vst [vmem:[%s270 + $0x10] sm:$0xff] %v725
          %758 = vst [vmem:[%s270 + $0x18] sm:$0xff] %v726
          %759 = vst [vmem:[%s270 + $0x20] sm:$0xff] %v727
          %760 = vst [vmem:[%s270 + $0x28] sm:$0xff] %v728
          %761 = vst [vmem:[%s270 + $0x30] sm:$0xff] %v729
          %762 = vst [vmem:[%s270 + $0x38] sm:$0xff] %v730
          %763 = vst [vmem:[%s270 + $0x40] sm:$0xff] %v731
          %764 = vst [vmem:[%s270 + $0x48] sm:$0xff] %v732
          %765 = vst [vmem:[%s270 + $0x50] sm:$0xff] %v733
          %766 = vst [vmem:[%s270 + $0x58] sm:$0xff] %v734
          %767 = vst [vmem:[%s270 + $0x60] sm:$0xff] %v735
          %768 = vst [vmem:[%s270 + $0x68] sm:$0xff] %v736
          %769 = vst [vmem:[%s270 + $0x70] sm:$0xff] %v737
          %770 = vst [vmem:[%s270 + $0x78] sm:$0xff] %v738
          %771 = vst [vmem:[%s270 + $0x80] sm:$0xff] %v739
          %772 = vst [vmem:[%s270 + $0x88] sm:$0xff] %v740
          %773 = vst [vmem:[%s270 + $0x90] sm:$0xff] %v741
          %774 = vst [vmem:[%s270 + $0x98] sm:$0xff] %v742
          %775 = vst [vmem:[%s270 + $0xa0] sm:$0xff] %v743
          %776 = vst [vmem:[%s270 + $0xa8] sm:$0xff] %v744
          %777 = vst [vmem:[%s270 + $0xb0] sm:$0xff] %v745
          %778 = vst [vmem:[%s270 + $0xb8] sm:$0xff] %v746
          %779 = vst [vmem:[%s270 + $0xc0] sm:$0xff] %v747
          %780 = vst [vmem:[%s270 + $0xc8] sm:$0xff] %v748
          %781 = vst [vmem:[%s270 + $0xd0] sm:$0xff] %v749
          %782 = vst [vmem:[%s270 + $0xd8] sm:$0xff] %v750
          %783 = vst [vmem:[%s270 + $0xe0] sm:$0xff] %v751
          %784 = vst [vmem:[%s270 + $0xe8] sm:$0xff] %v752
          %785 = vst [vmem:[%s270 + $0xf0] sm:$0xff] %v753
          %786 = vst [vmem:[%s270 + $0xf8] sm:$0xff] %v754
        $region44: #{tpu_custom_call.1} parent=39 // pred_fallthru
          _
        %p787 = scmp.gt.s32.totalorder %s24, 0
        // Predicated region
        $region45: #{tpu_custom_call.1} parent=39 // pred_check
          %p788 = pneg %p787
        $region46: #{tpu_custom_call.1} parent=39 // pred_check_branch
          %790 = sbr.rel (%p788) target = $region48
        $region47: #{tpu_custom_call.1} parent=39 // pred_region
          %v791 = vld [vmem:[%s270] sm:$0xff]
          %v792 = vld [vmem:[%s270 + $0x8] sm:$0xff]
          %v793 = vld [vmem:[%s270 + $0x10] sm:$0xff]
          %v794 = vld [vmem:[%s270 + $0x18] sm:$0xff]
          %v795 = vld [vmem:[%s270 + $0x20] sm:$0xff]
          %v796 = vld [vmem:[%s270 + $0x28] sm:$0xff]
          %v797 = vld [vmem:[%s270 + $0x30] sm:$0xff]
          %v798 = vld [vmem:[%s270 + $0x38] sm:$0xff]
          %v799 = vld [vmem:[%s270 + $0x40] sm:$0xff]
          %v800 = vld [vmem:[%s270 + $0x48] sm:$0xff]
          %v801 = vld [vmem:[%s270 + $0x50] sm:$0xff]
          %v802 = vld [vmem:[%s270 + $0x58] sm:$0xff]
          %v803 = vld [vmem:[%s270 + $0x60] sm:$0xff]
          %v804 = vld [vmem:[%s270 + $0x68] sm:$0xff]
          %v805 = vld [vmem:[%s270 + $0x70] sm:$0xff]
          %v806 = vld [vmem:[%s270 + $0x78] sm:$0xff]
          %v807 = vld [vmem:[%s270 + $0x80] sm:$0xff]
          %v808 = vld [vmem:[%s270 + $0x88] sm:$0xff]
          %v809 = vld [vmem:[%s270 + $0x90] sm:$0xff]
          %v810 = vld [vmem:[%s270 + $0x98] sm:$0xff]
          %v811 = vld [vmem:[%s270 + $0xa0] sm:$0xff]
          %v812 = vld [vmem:[%s270 + $0xa8] sm:$0xff]
          %v813 = vld [vmem:[%s270 + $0xb0] sm:$0xff]
          %v814 = vld [vmem:[%s270 + $0xb8] sm:$0xff]
          %v815 = vld [vmem:[%s270 + $0xc0] sm:$0xff]
          %v816 = vld [vmem:[%s270 + $0xc8] sm:$0xff]
          %v817 = vld [vmem:[%s270 + $0xd0] sm:$0xff]
          %v818 = vld [vmem:[%s270 + $0xd8] sm:$0xff]
          %v819 = vld [vmem:[%s270 + $0xe0] sm:$0xff]
          %v820 = vld [vmem:[%s270 + $0xe8] sm:$0xff]
          %v821 = vld [vmem:[%s270 + $0xf0] sm:$0xff]
          %v822 = vld [vmem:[%s270 + $0xf8] sm:$0xff]
          %v823 = vadd.f32 %v791, %v636
          %v824 = vadd.f32 %v792, %v638
          %v825 = vadd.f32 %v793, %v641
          %v826 = vadd.f32 %v794, %v643
          %v827 = vadd.f32 %v795, %v646
          %v828 = vadd.f32 %v796, %v648
          %v829 = vadd.f32 %v797, %v651
          %v830 = vadd.f32 %v798, %v653
          %v831 = vadd.f32 %v799, %v656
          %v832 = vadd.f32 %v800, %v658
          %v833 = vadd.f32 %v801, %v661
          %v834 = vadd.f32 %v802, %v663
          %v835 = vadd.f32 %v803, %v666
          %v836 = vadd.f32 %v804, %v668
          %v837 = vadd.f32 %v805, %v671
          %v838 = vadd.f32 %v806, %v673
          %v839 = vadd.f32 %v807, %v676
          %v840 = vadd.f32 %v808, %v678
          %v841 = vadd.f32 %v809, %v681
          %v842 = vadd.f32 %v810, %v683
          %v843 = vadd.f32 %v811, %v686
          %v844 = vadd.f32 %v812, %v688
          %v845 = vadd.f32 %v813, %v691
          %v846 = vadd.f32 %v814, %v693
          %v847 = vadd.f32 %v815, %v696
          %v848 = vadd.f32 %v816, %v698
          %v849 = vadd.f32 %v817, %v701
          %v850 = vadd.f32 %v818, %v703
          %v851 = vadd.f32 %v819, %v706
          %v852 = vadd.f32 %v820, %v708
          %v853 = vadd.f32 %v821, %v711
          %v854 = vadd.f32 %v822, %v713
          %855 = vst [vmem:[%s270] sm:$0xff] %v823
          %856 = vst [vmem:[%s270 + $0x8] sm:$0xff] %v824
          %857 = vst [vmem:[%s270 + $0x10] sm:$0xff] %v825
          %858 = vst [vmem:[%s270 + $0x18] sm:$0xff] %v826
          %859 = vst [vmem:[%s270 + $0x20] sm:$0xff] %v827
          %860 = vst [vmem:[%s270 + $0x28] sm:$0xff] %v828
          %861 = vst [vmem:[%s270 + $0x30] sm:$0xff] %v829
          %862 = vst [vmem:[%s270 + $0x38] sm:$0xff] %v830
          %863 = vst [vmem:[%s270 + $0x40] sm:$0xff] %v831
          %864 = vst [vmem:[%s270 + $0x48] sm:$0xff] %v832
          %865 = vst [vmem:[%s270 + $0x50] sm:$0xff] %v833
          %866 = vst [vmem:[%s270 + $0x58] sm:$0xff] %v834
          %867 = vst [vmem:[%s270 + $0x60] sm:$0xff] %v835
          %868 = vst [vmem:[%s270 + $0x68] sm:$0xff] %v836
          %869 = vst [vmem:[%s270 + $0x70] sm:$0xff] %v837
          %870 = vst [vmem:[%s270 + $0x78] sm:$0xff] %v838
          %871 = vst [vmem:[%s270 + $0x80] sm:$0xff] %v839
          %872 = vst [vmem:[%s270 + $0x88] sm:$0xff] %v840
          %873 = vst [vmem:[%s270 + $0x90] sm:$0xff] %v841
          %874 = vst [vmem:[%s270 + $0x98] sm:$0xff] %v842
          %875 = vst [vmem:[%s270 + $0xa0] sm:$0xff] %v843
          %876 = vst [vmem:[%s270 + $0xa8] sm:$0xff] %v844
          %877 = vst [vmem:[%s270 + $0xb0] sm:$0xff] %v845
          %878 = vst [vmem:[%s270 + $0xb8] sm:$0xff] %v846
          %879 = vst [vmem:[%s270 + $0xc0] sm:$0xff] %v847
          %880 = vst [vmem:[%s270 + $0xc8] sm:$0xff] %v848
          %881 = vst [vmem:[%s270 + $0xd0] sm:$0xff] %v849
          %882 = vst [vmem:[%s270 + $0xd8] sm:$0xff] %v850
          %883 = vst [vmem:[%s270 + $0xe0] sm:$0xff] %v851
          %884 = vst [vmem:[%s270 + $0xe8] sm:$0xff] %v852
          %885 = vst [vmem:[%s270 + $0xf0] sm:$0xff] %v853
          %886 = vst [vmem:[%s270 + $0xf8] sm:$0xff] %v854
        $region48: #{tpu_custom_call.1} parent=39 // pred_fallthru
          _
        %s887 = sand.u32 %s164, 1
        %s888 = scalar_lea.sflag [#allocation3], %s887
        %s889 = sand.u32 %s164, 1
        %s890 = smul.addr %s889, 256
        %s891 = scalar_lea.vmem [#allocation2], %s890
        // Predicated region
        $region49: #{tpu_custom_call.1} parent=39 // pred_check
          %p892 = pneg %p174
        $region50: #{tpu_custom_call.1} parent=39 // pred_check_branch
          %894 = sbr.rel (%p892) target = $region52
        $region51: #{tpu_custom_call.1} parent=39 // pred_region
          %s895 = smul.u32 32, %s23
          %897 = vsyncadd %s888, 0
          %s898 = smul.addr %s895, 8
          %s899 = scalar_lea.hbm %s5, %s898
          %s900 = sshll.u32 %s891, 4
          %s901 = int_to_ptr.vmem [resolvable:$true] %s900
          %s902 = sshll.u32 %s899, 4
          %s903 = int_to_ptr.hbm [resolvable:$true] %s902
          %908 = dma.vmem_to_hbm [thread:$0]  %s901, 4096, %s903, %s888, 128, 128, 8
        $region52: #{tpu_custom_call.1} parent=39 // pred_fallthru
          _
      $region40: #{tpu_custom_call.1} parent=5 // pred_fallthru
        _
      %p909 = scmp.le.s32.totalorder 2, %s14
      // Predicated region
      $region53: #{tpu_custom_call.1} parent=5 // pred_check
        %p910 = pneg %p909
      $region54: #{tpu_custom_call.1} parent=5 // pred_check_branch
        %912 = sbr.rel (%p910) target = $region56
      $region55: #{tpu_custom_call.1} parent=5 // pred_region
        %s913 = ssub.s32 %s14, 2
        // Predicated region
        $region57: #{tpu_custom_call.1} parent=55 // pred_check
          %p914 = pneg %p180
        $region58: #{tpu_custom_call.1} parent=55 // pred_check_branch
          %916 = sbr.rel (%p914) target = $region60
        $region59: #{tpu_custom_call.1} parent=55 // pred_region
          %s917 = sand.u32 %s165, 1
          %s918 = scalar_lea.sflag [#allocation3], %s917
          %s919 = sand.u32 %s165, 1
          %s920 = smul.addr %s919, 256
          %s921 = scalar_lea.vmem [#allocation2], %s920
          %923 = dma.done %s918, 4096
        $region60: #{tpu_custom_call.1} parent=55 // pred_fallthru
          _
      $region56: #{tpu_custom_call.1} parent=5 // pred_fallthru
        _
    $region6: #{tpu_custom_call.1} parent=1 // loop_footer
      %s18 = sadd.s32 1, %s14
    $region7: #{tpu_custom_call.1} parent=1 // loop_footer_branch
      %13 = sbr.rel target = $region3
    $region8: #{tpu_custom_call.1} parent=1 // loop_exit
      _
    %924 = vsyncpa [#allocation3], 1
    %s925 = scalar_lea.sflag [#allocation3], 1
    %926 = vsyncpa %s925, 1

</llo_original>
